<compile_context>
chip_gen: v5e
topology: v5e:2x2
jax: 0.10.0
libtpu: 0.0.40
codegen_flags: <defaults>
</compile_context>

<pallas_src>
import numpy as np
import jax
import jax.numpy as jnp
from jax import lax
from jax.experimental import pallas as pl
from jax.experimental.pallas import tpu as pltpu

# ----- problem sizes (small, deterministic) ---------------------------------
N = 32          # number of nodes
D = 32          # raw node-feature dim
T = 8           # number of snapshots (time steps); power of 2
F = 16          # embedding dim  (classifier in_feature=16)
H = 16          # classifier hidden dim
C = 2           # classifier output classes
E = 8           # sampled edges per snapshot

assert (T & (T - 1)) == 0, "T must be a power of two for the shift-based block mask"
LOG2_T = int(np.log2(T))


# ============================================================================
# Single fused kernel: structural GNN -> temporal attention -> edge classifier
# ============================================================================
def fused_dysat_kernel(a_ref, x_ref, ws_ref, wqkv_ref,
                       w1_ref, b1_ref, w2_ref, b2_ref,
                       cols_ref,
                       str_ref, fin_ref, logits_ref):
    f32 = jnp.float32
    bf16 = jnp.bfloat16
    NT = N * T

    # ---- structural layer: transform-then-aggregate (exact reordering) ----
    xw = jnp.dot(x_ref[...], ws_ref[...], preferred_element_type=f32)       # (N, F) tiny, f32
    a = a_ref[...]                                                          # (NT, N) bf16, 0/1 exact
    deg = jnp.sum(a.astype(f32), axis=1, keepdims=True)                     # (NT, 1), >= 1 (self loops)
    agg = jnp.dot(a, xw.astype(bf16), preferred_element_type=f32)           # (NT, F)
    str_flat = jnp.maximum(agg * pl.reciprocal(deg, approx=True), 0.0)      # EUP recip, f32
    str_ref[...] = str_flat

    # ---- temporal layer: block-diagonal causal self-attention ----
    qkv = jnp.dot(str_flat.astype(bf16), wqkv_ref[...].astype(bf16),
                  preferred_element_type=f32)                               # (NT, 3F)
    q = qkv[:, 0 * F:1 * F].astype(bf16)
    k = qkv[:, 1 * F:2 * F].astype(bf16)
    v = qkv[:, 2 * F:3 * F].astype(bf16)
    # S[i, j] = q[i] . k[j]   (contract last dims; no materialized transpose)
    s = lax.dot_general(q, k, (((1,), (1,)), ((), ())),
                        preferred_element_type=f32)                         # (NT, NT) f32
    s = s * f32(1.0 / np.sqrt(F))
    ri = lax.broadcasted_iota(jnp.int32, (NT, NT), 0)
    ci = lax.broadcasted_iota(jnp.int32, (NT, NT), 1)
    same_node = jnp.right_shift(ri, LOG2_T) == jnp.right_shift(ci, LOG2_T)  # same T-block
    s = jnp.where(same_node & (ci <= ri), s, f32(-1e30))                    # causal, block-diag
    s = s - jnp.max(s, axis=-1, keepdims=True)                              # diagonal always valid
    p = jnp.exp(s)
    p = p * pl.reciprocal(jnp.sum(p, axis=-1, keepdims=True), approx=True)
    fin_flat = jnp.dot(p.astype(bf16), v, preferred_element_type=f32)       # (NT, F) f32
    fin_ref[...] = fin_flat

    # ---- edge classifier: fused one-hot gather + 2-layer MLP (all T*E edges) ----
    col = lax.broadcasted_iota(jnp.int32, (2 * T * E, NT), 1)
    oh = (col == cols_ref[...]).astype(bf16)                                # (2*T*E, NT)
    gathered = jnp.dot(oh, fin_flat.astype(bf16),
                       preferred_element_type=f32)                          # (2*T*E, F)
    inp = gathered[:T * E, :] * gathered[T * E:, :]                         # (T*E, F) src*tgt
    # MLP matmuls are tiny (64x16x16, 64x16x2): kept in f32 for precision margin.
    h = jnp.maximum(jnp.dot(inp, w1_ref[...], preferred_element_type=f32)
                    + b1_ref[...], 0.0)
    logits_ref[...] = (jnp.dot(h, w2_ref[...], preferred_element_type=f32)
                       + b2_ref[...])


# ============================================================================
# Wrapper (mirrors My_Model.forward: returns (str_emb, final_emb, outputs))
# ============================================================================
@jax.jit
def my_model_forward(A, X, samples, params):
    Ws, Wq, Wk, Wv, W1, b1, W2, b2 = params

    # Node-major adjacency rows (row n*T + t = A[t, n, :]); 0/1 exact in bf16.
    A_nm = jnp.transpose(A, (1, 0, 2)).reshape(N * T, N).astype(jnp.bfloat16)
    # Fused QKV weight (F, 3F).
    Wqkv = jnp.concatenate([Wq, Wk, Wv], axis=1)

    # Flat gather columns into the node-major (N*T, F) embedding: node*T + t,
    # src rows stacked on tgt rows -> one (2*T*E, 1) index vector.
    t_idx = jnp.arange(T, dtype=jnp.int32)[:, None]                      # (T, 1)
    src_col = (samples[:, :, 0] * T + t_idx).reshape(T * E, 1)
    tgt_col = (samples[:, :, 1] * T + t_idx).reshape(T * E, 1)
    cols = jnp.concatenate([src_col, tgt_col], axis=0)                   # (2*T*E, 1)

    vmem = pl.BlockSpec(memory_space=pltpu.MemorySpace.VMEM)
    str_flat, fin_flat, logits = pl.pallas_call(
        fused_dysat_kernel,
        out_shape=(
            jax.ShapeDtypeStruct((N * T, F), jnp.float32),   # structural embeddings
            jax.ShapeDtypeStruct((N * T, F), jnp.float32),   # temporal (final) embeddings
            jax.ShapeDtypeStruct((T * E, C), jnp.float32),   # edge logits, all snapshots
        ),
        in_specs=[vmem] * 9,
        out_specs=(vmem, vmem, vmem),
    )(A_nm, X, Ws, Wqkv, W1, b1, W2, b2, cols)

    # [N, T, F] is a free reshape of the node-major flat layout (no transpose).
    str_emb = str_flat.reshape(N, T, F)
    final_emb = fin_flat.reshape(N, T, F)
    logits = logits.reshape(T, E, C)
    outputs = [logits[t] for t in range(T)]    # per-time list, as in the PyTorch module
    return str_emb, final_emb, outputs


# ============================================================================
# Pure-JAX reference (for correctness check)
# ============================================================================
def reference_forward(A, X, samples, params):
    Ws, Wq, Wk, Wv, W1, b1, W2, b2 = params
    deg = A.sum(axis=2, keepdims=True)
    A_norm = A / deg
    str_tnf = jax.nn.relu(jnp.einsum("tnm,md->tnd", A_norm, X) @ Ws)   # (T, N, F)
    x = jnp.transpose(str_tnf, (1, 0, 2))                              # (N, T, F)
    q, k, v = x @ Wq, x @ Wk, x @ Wv
    s = jnp.einsum("ntf,nsf->nts", q, k) / np.sqrt(F)
    qi = np.arange(T)[:, None]
    kj = np.arange(T)[None, :]
    s = jnp.where(jnp.asarray(kj <= qi), s, -1e30)
    p = jax.nn.softmax(s, axis=-1)
    final = jnp.einsum("nts,nsf->ntf", p, v)                           # (N, T, F)
    outs = []
    for t in range(T):
        emb = final[:, t, :]
        inp = emb[samples[t, :, 0]] * emb[samples[t, :, 1]]
        h = jax.nn.relu(inp @ W1 + b1)
        outs.append(h @ W2 + b2)
    return jnp.transpose(str_tnf, (1, 0, 2)), final, outs


# ============================================================================
if __name__ == "__main__":
    key = jax.random.PRNGKey(0)
    ks = jax.random.split(key, 12)

    # snapshots: per-time dense adjacency with self loops
    adj = (jax.random.uniform(ks[0], (T, N, N)) < 0.3).astype(jnp.float32)
    adj = jnp.maximum(adj, jnp.transpose(adj, (0, 2, 1)))                 # symmetric
    A = jnp.minimum(adj + jnp.eye(N, dtype=jnp.float32)[None], 1.0)       # + self loops
    X = jax.random.normal(ks[1], (N, D), dtype=jnp.float32)

    # sampled (source, target) node-id pairs per snapshot
    samples = jax.random.randint(ks[2], (T, E, 2), 0, N, dtype=jnp.int32)

    # deterministic parameters (DySAT structural/temporal + classifier 16->16->2)
    Ws = jax.random.normal(ks[3], (D, F), dtype=jnp.float32) / np.sqrt(D)
    Wq = jax.random.normal(ks[4], (F, F), dtype=jnp.float32) / np.sqrt(F)
    Wk = jax.random.normal(ks[5], (F, F), dtype=jnp.float32) / np.sqrt(F)
    Wv = jax.random.normal(ks[6], (F, F), dtype=jnp.float32) / np.sqrt(F)
    W1 = jax.random.normal(ks[7], (F, H), dtype=jnp.float32) / np.sqrt(F)
    b1 = 0.1 * jnp.ones((1, H), dtype=jnp.float32)
    W2 = jax.random.normal(ks[8], (H, C), dtype=jnp.float32) / np.sqrt(H)
    b2 = jnp.zeros((1, C), dtype=jnp.float32)
    params = (Ws, Wq, Wk, Wv, W1, b1, W2, b2)

    str_emb, final_emb, outputs = my_model_forward(A, X, samples, params)
    jax.block_until_ready(final_emb)
    for o in outputs:
        jax.block_until_ready(o)

    # correctness check vs. pure-JAX reference (bf16 MXU operands, f32 accum)
    str_ref, fin_ref, outs_ref = reference_forward(A, X, samples, params)
    np.testing.assert_allclose(np.asarray(str_emb), np.asarray(str_ref),
                               rtol=5e-2, atol=5e-2)
    np.testing.assert_allclose(np.asarray(final_emb), np.asarray(fin_ref),
                               rtol=5e-2, atol=5e-2)
    np.testing.assert_allclose(np.asarray(jnp.stack(outputs)),
                               np.asarray(jnp.stack(outs_ref)),
                               rtol=5e-2, atol=5e-2)

    print("KERNEL_OK")
</pallas_src>

<mosaic_0001>
module attributes {stable_mosaic.version = 11 : i64} {
  func.func @fused_dysat_kernel(%arg0: memref<256x32xbf16, #tpu.memory_space<vmem>>, %arg1: memref<32x32xf32, #tpu.memory_space<vmem>>, %arg2: memref<32x16xf32, #tpu.memory_space<vmem>>, %arg3: memref<16x48xf32, #tpu.memory_space<vmem>>, %arg4: memref<16x16xf32, #tpu.memory_space<vmem>>, %arg5: memref<1x16xf32, #tpu.memory_space<vmem>>, %arg6: memref<16x2xf32, #tpu.memory_space<vmem>>, %arg7: memref<1x2xf32, #tpu.memory_space<vmem>>, %arg8: memref<128x1xi32, #tpu.memory_space<vmem>>, %arg9: memref<256x16xf32, #tpu.memory_space<vmem>>, %arg10: memref<256x16xf32, #tpu.memory_space<vmem>>, %arg11: memref<64x2xf32, #tpu.memory_space<vmem>>) attributes {dimension_semantics = [], scalar_prefetch = 0 : i64, scratch_operands = 0 : i64, tpu.core_type = #tpu.core_type<tc>} {
    %c0 = arith.constant 0 : index
    %c0_0 = arith.constant 0 : index
    %0 = vector.load %arg1[%c0, %c0_0] : memref<32x32xf32, #tpu.memory_space<vmem>>, vector<32x32xf32>
    %c0_1 = arith.constant 0 : index
    %c0_2 = arith.constant 0 : index
    %1 = vector.load %arg2[%c0_1, %c0_2] : memref<32x16xf32, #tpu.memory_space<vmem>>, vector<32x16xf32>
    %cst = arith.constant dense<0.000000e+00> : vector<32x16xf32>
    %2 = tpu.matmul %0, %1, %cst {dimension_numbers = #tpu.dot_dimension_numbers<[1], [0], [0], [1], [0, 0, 1, 1], [], []>} : vector<32x32xf32>, vector<32x16xf32>, vector<32x16xf32> -> vector<32x16xf32>
    %c0_3 = arith.constant 0 : index
    %c0_4 = arith.constant 0 : index
    %3 = vector.load %arg0[%c0_3, %c0_4] : memref<256x32xbf16, #tpu.memory_space<vmem>>, vector<256x32xbf16>
    %4 = arith.extf %3 : vector<256x32xbf16> to vector<256x32xf32>
    %cst_5 = arith.constant dense<0.000000e+00> : vector<256xf32>
    %5 = vector.multi_reduction <add>, %4, %cst_5 [1] : vector<256x32xf32> to vector<256xf32>
    %6 = vector.shape_cast %5 : vector<256xf32> to vector<256x1xf32>
    %7 = arith.truncf %2 : vector<32x16xf32> to vector<32x16xbf16>
    %cst_6 = arith.constant dense<0.000000e+00> : vector<256x16xf32>
    %8 = tpu.matmul %3, %7, %cst_6 {dimension_numbers = #tpu.dot_dimension_numbers<[1], [0], [0], [1], [0, 0, 1, 1], [], []>} : vector<256x32xbf16>, vector<32x16xbf16>, vector<256x16xf32> -> vector<256x16xf32>
    %9 = tpu.reciprocal %6 {approx = true} : vector<256x1xf32> -> vector<256x1xf32>
    %10 = vector.broadcast %9 : vector<256x1xf32> to vector<256x16xf32>
    %11 = arith.mulf %8, %10 : vector<256x16xf32>
    %cst_7 = arith.constant 0.000000e+00 : f32
    %12 = vector.broadcast %cst_7 : f32 to vector<256x16xf32>
    %13 = arith.maximumf %11, %12 : vector<256x16xf32>
    %c0_8 = arith.constant 0 : index
    %c0_9 = arith.constant 0 : index
    %14 = vector.load %arg9[%c0_8, %c0_9] : memref<256x16xf32, #tpu.memory_space<vmem>>, vector<256x16xf32>
    tpu.vector_store %arg9[%c0_8, %c0_9], %13 {strides = array<i32>} : memref<256x16xf32, #tpu.memory_space<vmem>>, vector<256x16xf32>,
    %15 = arith.truncf %13 : vector<256x16xf32> to vector<256x16xbf16>
    %c0_10 = arith.constant 0 : index
    %c0_11 = arith.constant 0 : index
    %16 = vector.load %arg3[%c0_10, %c0_11] : memref<16x48xf32, #tpu.memory_space<vmem>>, vector<16x48xf32>
    %17 = arith.truncf %16 : vector<16x48xf32> to vector<16x48xbf16>
    %cst_12 = arith.constant dense<0.000000e+00> : vector<256x48xf32>
    %18 = tpu.matmul %15, %17, %cst_12 {dimension_numbers = #tpu.dot_dimension_numbers<[1], [0], [0], [1], [0, 0, 1, 1], [], []>} : vector<256x16xbf16>, vector<16x48xbf16>, vector<256x48xf32> -> vector<256x48xf32>
    %19 = vector.extract_strided_slice %18 {offsets = [0, 0], sizes = [256, 16], strides = [1, 1]} : vector<256x48xf32> to vector<256x16xf32>
    %20 = arith.truncf %19 : vector<256x16xf32> to vector<256x16xbf16>
    %21 = vector.extract_strided_slice %18 {offsets = [0, 16], sizes = [256, 16], strides = [1, 1]} : vector<256x48xf32> to vector<256x16xf32>
    %22 = arith.truncf %21 : vector<256x16xf32> to vector<256x16xbf16>
    %23 = vector.extract_strided_slice %18 {offsets = [0, 32], sizes = [256, 16], strides = [1, 1]} : vector<256x48xf32> to vector<256x16xf32>
    %24 = arith.truncf %23 : vector<256x16xf32> to vector<256x16xbf16>
    %cst_13 = arith.constant dense<0.000000e+00> : vector<256x256xf32>
    %25 = tpu.matmul %20, %22, %cst_13 {dimension_numbers = #tpu.dot_dimension_numbers<[1], [1], [0], [0], [0, 0, 1, 0], [], []>} : vector<256x16xbf16>, vector<256x16xbf16>, vector<256x256xf32> -> vector<256x256xf32>
    %cst_14 = arith.constant 2.500000e-01 : f32
    %26 = vector.broadcast %cst_14 : f32 to vector<256x256xf32>
    %27 = arith.mulf %25, %26 : vector<256x256xf32>
    %28 = tpu.iota {dimensions = array<i32: 0>} : vector<256x256xi32>
    %29 = tpu.iota {dimensions = array<i32: 1>} : vector<256x256xi32>
    %c3_i32 = arith.constant 3 : i32
    %30 = vector.broadcast %c3_i32 : i32 to vector<256x256xi32>
    %31 = arith.shrsi %28, %30 : vector<256x256xi32>
    %c3_i32_15 = arith.constant 3 : i32
    %32 = vector.broadcast %c3_i32_15 : i32 to vector<256x256xi32>
    %33 = arith.shrsi %29, %32 : vector<256x256xi32>
    %34 = arith.cmpi eq, %31, %33 : vector<256x256xi32>
    %35 = arith.cmpi sle, %29, %28 : vector<256x256xi32>
    %36 = arith.andi %34, %35 : vector<256x256xi1>
    %cst_16 = arith.constant -1.000000e+30 : f32
    %37 = vector.broadcast %cst_16 : f32 to vector<256x256xf32>
    %38 = arith.select %36, %27, %37 : vector<256x256xi1>, vector<256x256xf32>
    %cst_17 = arith.constant dense<0xFF800000> : vector<256xf32>
    %39 = vector.multi_reduction <maximumf>, %38, %cst_17 [1] : vector<256x256xf32> to vector<256xf32>
    %40 = vector.shape_cast %39 : vector<256xf32> to vector<256x1xf32>
    %41 = vector.broadcast %40 : vector<256x1xf32> to vector<256x256xf32>
    %42 = arith.subf %38, %41 : vector<256x256xf32>
    %43 = math.exp %42 : vector<256x256xf32>
    %cst_18 = arith.constant dense<0.000000e+00> : vector<256xf32>
    %44 = vector.multi_reduction <add>, %43, %cst_18 [1] : vector<256x256xf32> to vector<256xf32>
    %45 = vector.shape_cast %44 : vector<256xf32> to vector<256x1xf32>
    %46 = tpu.reciprocal %45 {approx = true} : vector<256x1xf32> -> vector<256x1xf32>
    %47 = vector.broadcast %46 : vector<256x1xf32> to vector<256x256xf32>
    %48 = arith.mulf %43, %47 : vector<256x256xf32>
    %49 = arith.truncf %48 : vector<256x256xf32> to vector<256x256xbf16>
    %cst_19 = arith.constant dense<0.000000e+00> : vector<256x16xf32>
    %50 = tpu.matmul %49, %24, %cst_19 {dimension_numbers = #tpu.dot_dimension_numbers<[1], [0], [0], [1], [0, 0, 1, 1], [], []>} : vector<256x256xbf16>, vector<256x16xbf16>, vector<256x16xf32> -> vector<256x16xf32>
    %c0_20 = arith.constant 0 : index
    %c0_21 = arith.constant 0 : index
    %51 = vector.load %arg10[%c0_20, %c0_21] : memref<256x16xf32, #tpu.memory_space<vmem>>, vector<256x16xf32>
    tpu.vector_store %arg10[%c0_20, %c0_21], %50 {strides = array<i32>} : memref<256x16xf32, #tpu.memory_space<vmem>>, vector<256x16xf32>,
    %52 = tpu.iota {dimensions = array<i32: 1>} : vector<128x256xi32>
    %c0_22 = arith.constant 0 : index
    %c0_23 = arith.constant 0 : index
    %53 = vector.load %arg8[%c0_22, %c0_23] : memref<128x1xi32, #tpu.memory_space<vmem>>, vector<128x1xi32>
    %54 = vector.broadcast %53 : vector<128x1xi32> to vector<128x256xi32>
    %55 = arith.cmpi eq, %52, %54 : vector<128x256xi32>
    %56 = arith.extui %55 : vector<128x256xi1> to vector<128x256xi32>
    %57 = arith.sitofp %56 : vector<128x256xi32> to vector<128x256xf32>
    %58 = arith.truncf %57 : vector<128x256xf32> to vector<128x256xbf16>
    %59 = arith.truncf %50 : vector<256x16xf32> to vector<256x16xbf16>
    %cst_24 = arith.constant dense<0.000000e+00> : vector<128x16xf32>
    %60 = tpu.matmul %58, %59, %cst_24 {dimension_numbers = #tpu.dot_dimension_numbers<[1], [0], [0], [1], [0, 0, 1, 1], [], []>} : vector<128x256xbf16>, vector<256x16xbf16>, vector<128x16xf32> -> vector<128x16xf32>
    %61 = vector.extract_strided_slice %60 {offsets = [0, 0], sizes = [64, 16], strides = [1, 1]} : vector<128x16xf32> to vector<64x16xf32>
    %62 = vector.extract_strided_slice %60 {offsets = [64, 0], sizes = [64, 16], strides = [1, 1]} : vector<128x16xf32> to vector<64x16xf32>
    %63 = arith.mulf %61, %62 : vector<64x16xf32>
    %c0_25 = arith.constant 0 : index
    %c0_26 = arith.constant 0 : index
    %64 = vector.load %arg4[%c0_25, %c0_26] : memref<16x16xf32, #tpu.memory_space<vmem>>, vector<16x16xf32>
    %cst_27 = arith.constant dense<0.000000e+00> : vector<64x16xf32>
    %65 = tpu.matmul %63, %64, %cst_27 {dimension_numbers = #tpu.dot_dimension_numbers<[1], [0], [0], [1], [0, 0, 1, 1], [], []>} : vector<64x16xf32>, vector<16x16xf32>, vector<64x16xf32> -> vector<64x16xf32>
    %c0_28 = arith.constant 0 : index
    %c0_29 = arith.constant 0 : index
    %66 = vector.load %arg5[%c0_28, %c0_29] : memref<1x16xf32, #tpu.memory_space<vmem>>, vector<1x16xf32>
    %67 = vector.broadcast %66 : vector<1x16xf32> to vector<64x16xf32>
    %68 = arith.addf %65, %67 : vector<64x16xf32>
    %cst_30 = arith.constant 0.000000e+00 : f32
    %69 = vector.broadcast %cst_30 : f32 to vector<64x16xf32>
    %70 = arith.maximumf %68, %69 : vector<64x16xf32>
    %c0_31 = arith.constant 0 : index
    %c0_32 = arith.constant 0 : index
    %71 = vector.load %arg6[%c0_31, %c0_32] : memref<16x2xf32, #tpu.memory_space<vmem>>, vector<16x2xf32>
    %cst_33 = arith.constant dense<0.000000e+00> : vector<64x2xf32>
    %72 = tpu.matmul %70, %71, %cst_33 {dimension_numbers = #tpu.dot_dimension_numbers<[1], [0], [0], [1], [0, 0, 1, 1], [], []>} : vector<64x16xf32>, vector<16x2xf32>, vector<64x2xf32> -> vector<64x2xf32>
    %c0_34 = arith.constant 0 : index
    %c0_35 = arith.constant 0 : index
    %73 = vector.load %arg7[%c0_34, %c0_35] : memref<1x2xf32, #tpu.memory_space<vmem>>, vector<1x2xf32>
    %74 = vector.broadcast %73 : vector<1x2xf32> to vector<64x2xf32>
    %75 = arith.addf %72, %74 : vector<64x2xf32>
    %c0_36 = arith.constant 0 : index
    %c0_37 = arith.constant 0 : index
    %76 = vector.load %arg11[%c0_36, %c0_37] : memref<64x2xf32, #tpu.memory_space<vmem>>, vector<64x2xf32>
    tpu.vector_store %arg11[%c0_36, %c0_37], %75 {strides = array<i32>} : memref<64x2xf32, #tpu.memory_space<vmem>>, vector<64x2xf32>,
    return
  }
}

</mosaic_0001>

<llo_original>
// kernel: my_model_forward.1
$region0: #{my_model_forward.1}
  #allocation0 [shape = 'u32[]', space=smem, size = 0x4, offset = 0x4, fixed_abs, tag = 'smem constant byte address 0x4 - core index']
  #allocation1 [shape = 'u32[72,128]{1,0:T(1,128)}', space=vmem, size = 0x9000, scoped, tag = 'internal scratch']
  %s0 = inlined_call_operand.vmem [shape: bf16[256,32], index: 0, kind: input, shape index: {}]
  %s1 = inlined_call_operand.vmem [shape: f32[32,32], index: 1, kind: input, shape index: {}]
  %s2 = inlined_call_operand.vmem [shape: f32[32,16], index: 2, kind: input, shape index: {}]
  %s3 = inlined_call_operand.vmem [shape: f32[16,48], index: 3, kind: input, shape index: {}]
  %s4 = inlined_call_operand.vmem [shape: f32[16,16], index: 4, kind: input, shape index: {}]
  %s5 = inlined_call_operand.vmem [shape: f32[1,16], index: 5, kind: input, shape index: {}]
  %s6 = inlined_call_operand.vmem [shape: f32[16,2], index: 6, kind: input, shape index: {}]
  %s7 = inlined_call_operand.vmem [shape: f32[1,2], index: 7, kind: input, shape index: {}]
  %s8 = inlined_call_operand.vmem [shape: s32[128,1], index: 8, kind: input, shape index: {}]
  %s9 = inlined_call_operand.vmem [shape: f32[256,16], index: 9, kind: output, shape index: {0}]
  %s10 = inlined_call_operand.vmem [shape: f32[256,16], index: 10, kind: output, shape index: {1}]
  %s11 = inlined_call_operand.vmem [shape: f32[64,2], index: 11, kind: output, shape index: {2}]
  %12 = xla_tuple %s9, %s10, %s11
  %s13 = sld [smem:[#allocation0]]
  $region62: #{my_model_forward.1} parent=0
    _
  %s15 = ssub.s32 1, %s13
  %s16 = scalar_select 0, %s15, %s13
  // Predicated region
  $region2: #{my_model_forward.1} parent=0 // pred_check
    _
  $region3: #{my_model_forward.1} parent=0 // pred_check_branch
    %18 = sbr.rel (0) target = $region5
  $region4: #{my_model_forward.1} parent=0 // pred_region
    _
  $region5: #{my_model_forward.1} parent=0 // pred_fallthru
    _
  // Predicated region
  $region6: #{my_model_forward.1} parent=0 // pred_check
    _
  $region7: #{my_model_forward.1} parent=0 // pred_check_branch
    %20 = sbr.rel (0) target = $region9
  $region8: #{my_model_forward.1} parent=0 // pred_region
    _
  $region9: #{my_model_forward.1} parent=0 // pred_fallthru
    _
  // Predicated region
  $region10: #{my_model_forward.1} parent=0 // pred_check
    _
  $region11: #{my_model_forward.1} parent=0 // pred_check_branch
    %22 = sbr.rel (0) target = $region13
  $region12: #{my_model_forward.1} parent=0 // pred_region
    _
  $region13: #{my_model_forward.1} parent=0 // pred_fallthru
    _
  // Predicated region
  $region14: #{my_model_forward.1} parent=0 // pred_check
    _
  $region15: #{my_model_forward.1} parent=0 // pred_check_branch
    %24 = sbr.rel (0) target = $region17
  $region16: #{my_model_forward.1} parent=0 // pred_region
    _
  $region17: #{my_model_forward.1} parent=0 // pred_fallthru
    _
  // Predicated region
  $region18: #{my_model_forward.1} parent=0 // pred_check
    _
  $region19: #{my_model_forward.1} parent=0 // pred_check_branch
    %26 = sbr.rel (0) target = $region21
  $region20: #{my_model_forward.1} parent=0 // pred_region
    _
  $region21: #{my_model_forward.1} parent=0 // pred_fallthru
    _
  // Predicated region
  $region22: #{my_model_forward.1} parent=0 // pred_check
    _
  $region23: #{my_model_forward.1} parent=0 // pred_check_branch
    %28 = sbr.rel (0) target = $region25
  $region24: #{my_model_forward.1} parent=0 // pred_region
    _
  $region25: #{my_model_forward.1} parent=0 // pred_fallthru
    _
  // Predicated region
  $region26: #{my_model_forward.1} parent=0 // pred_check
    _
  $region27: #{my_model_forward.1} parent=0 // pred_check_branch
    %30 = sbr.rel (0) target = $region29
  $region28: #{my_model_forward.1} parent=0 // pred_region
    _
  $region29: #{my_model_forward.1} parent=0 // pred_fallthru
    _
  // Predicated region
  $region30: #{my_model_forward.1} parent=0 // pred_check
    _
  $region31: #{my_model_forward.1} parent=0 // pred_check_branch
    %32 = sbr.rel (0) target = $region33
  $region32: #{my_model_forward.1} parent=0 // pred_region
    _
  $region33: #{my_model_forward.1} parent=0 // pred_fallthru
    _
  // Predicated region
  $region34: #{my_model_forward.1} parent=0 // pred_check
    _
  $region35: #{my_model_forward.1} parent=0 // pred_check_branch
    %34 = sbr.rel (0) target = $region37
  $region36: #{my_model_forward.1} parent=0 // pred_region
    _
  $region37: #{my_model_forward.1} parent=0 // pred_fallthru
    _
  %v36 = vld [vmem:[%s1] sm:$0xff]
  %v37 = vld [vmem:[%s1 + $0x8] sm:$0xff]
  %v38 = vld [vmem:[%s1 + $0x10] sm:$0xff]
  %v39 = vld [vmem:[%s1 + $0x18] sm:$0xff]
  %v40 = vld [vmem:[%s2] sm:$0xff]
  %v41 = vld [vmem:[%s2 + $0x8] sm:$0xff]
  %v42 = vld [vmem:[%s2 + $0x10] sm:$0xff]
  %v43 = vld [vmem:[%s2 + $0x18] sm:$0xff]
  %vm44 = vcmask 261120
  %v46 = vsel %vm44, %v36, 0
  %v49 = vsel %vm44, %v37, 0
  %v52 = vsel %vm44, %v38, 0
  %v55 = vsel %vm44, %v39, 0
  %57 = vmatpush.msra.mxu0 0.0
  %58 = vmatpush.msra.mxu0 0.0
  %59 = vmatpush.msra.mxu0 0.0
  %60 = vmatpush.msra.mxu0 0.0
  %61 = vmatpush.msra.mxu0 0.0
  %62 = vmatpush.msra.mxu0 0.0
  %63 = vmatpush.msra.mxu0 0.0
  %64 = vmatpush.msra.mxu0 0.0
  %65 = vmatpush.msra.mxu0 0.0
  %66 = vmatpush.msra.mxu0 0.0
  %67 = vmatpush.msra.mxu0 0.0
  %68 = vmatpush.msra.mxu0 0.0
  %69 = vmatpush.msra.mxu0 %v43
  %70 = vmatpush.msra.mxu0 %v42
  %71 = vmatpush.msra.mxu0 %v41
  %72 = vmatpush.msra.mxu0 %v40
  %73 = vmatmul.f32.gmra.mxu0 %v46
  %v74 = vpop.f32.mrf.mxu0
  %v75 = vadd.f32 0.0, %v74
  %76 = vmatmul.f32.gmra.mxu0 %v49
  %v77 = vpop.f32.mrf.mxu0
  %v78 = vadd.f32 0.0, %v77
  %79 = vmatmul.f32.gmra.mxu0 %v52
  %v80 = vpop.f32.mrf.mxu0
  %v81 = vadd.f32 0.0, %v80
  %82 = vmatmul.f32.gmra.mxu0 %v55
  %v83 = vpop.f32.mrf.mxu0
  %v84 = vadd.f32 0.0, %v83
  %85 = vdwg.mxu0
  %v86 = vld [vmem:[%s0] sm:$0xf]
  %v87 = vld [vmem:[%s0 + $0x4] sm:$0xf]
  %v88 = vld [vmem:[%s0 + $0x8] sm:$0xf]
  %v89 = vld [vmem:[%s0 + $0xc] sm:$0xf]
  %v90 = vld [vmem:[%s0 + $0x10] sm:$0xf]
  %v91 = vld [vmem:[%s0 + $0x14] sm:$0xf]
  %v92 = vld [vmem:[%s0 + $0x18] sm:$0xf]
  %v93 = vld [vmem:[%s0 + $0x1c] sm:$0xf]
  %v94 = vld [vmem:[%s0 + $0x20] sm:$0xf]
  %v95 = vld [vmem:[%s0 + $0x24] sm:$0xf]
  %v96 = vld [vmem:[%s0 + $0x28] sm:$0xf]
  %v97 = vld [vmem:[%s0 + $0x2c] sm:$0xf]
  %v98 = vld [vmem:[%s0 + $0x30] sm:$0xf]
  %v99 = vld [vmem:[%s0 + $0x34] sm:$0xf]
  %v100 = vld [vmem:[%s0 + $0x38] sm:$0xf]
  %v101 = vld [vmem:[%s0 + $0x3c] sm:$0xf]
  %v102 = vld [vmem:[%s0 + $0x40] sm:$0xf]
  %v103 = vld [vmem:[%s0 + $0x44] sm:$0xf]
  %v104 = vld [vmem:[%s0 + $0x48] sm:$0xf]
  %v105 = vld [vmem:[%s0 + $0x4c] sm:$0xf]
  %v106 = vld [vmem:[%s0 + $0x50] sm:$0xf]
  %v107 = vld [vmem:[%s0 + $0x54] sm:$0xf]
  %v108 = vld [vmem:[%s0 + $0x58] sm:$0xf]
  %v109 = vld [vmem:[%s0 + $0x5c] sm:$0xf]
  %v110 = vld [vmem:[%s0 + $0x60] sm:$0xf]
  %v111 = vld [vmem:[%s0 + $0x64] sm:$0xf]
  %v112 = vld [vmem:[%s0 + $0x68] sm:$0xf]
  %v113 = vld [vmem:[%s0 + $0x6c] sm:$0xf]
  %v114 = vld [vmem:[%s0 + $0x70] sm:$0xf]
  %v115 = vld [vmem:[%s0 + $0x74] sm:$0xf]
  %v116 = vld [vmem:[%s0 + $0x78] sm:$0xf]
  %v117 = vld [vmem:[%s0 + $0x7c] sm:$0xf]
  %v118 = vunpack.c.l.bf16 %v86
  %v119 = vunpack.c.l.bf16 %v87
  %v120 = vunpack.c.l.bf16 %v88
  %v121 = vunpack.c.l.bf16 %v89
  %v122 = vunpack.c.l.bf16 %v90
  %v123 = vunpack.c.l.bf16 %v91
  %v124 = vunpack.c.l.bf16 %v92
  %v125 = vunpack.c.l.bf16 %v93
  %v126 = vunpack.c.l.bf16 %v94
  %v127 = vunpack.c.l.bf16 %v95
  %v128 = vunpack.c.l.bf16 %v96
  %v129 = vunpack.c.l.bf16 %v97
  %v130 = vunpack.c.l.bf16 %v98
  %v131 = vunpack.c.l.bf16 %v99
  %v132 = vunpack.c.l.bf16 %v100
  %v133 = vunpack.c.l.bf16 %v101
  %v134 = vunpack.c.l.bf16 %v102
  %v135 = vunpack.c.l.bf16 %v103
  %v136 = vunpack.c.l.bf16 %v104
  %v137 = vunpack.c.l.bf16 %v105
  %v138 = vunpack.c.l.bf16 %v106
  %v139 = vunpack.c.l.bf16 %v107
  %v140 = vunpack.c.l.bf16 %v108
  %v141 = vunpack.c.l.bf16 %v109
  %v142 = vunpack.c.l.bf16 %v110
  %v143 = vunpack.c.l.bf16 %v111
  %v144 = vunpack.c.l.bf16 %v112
  %v145 = vunpack.c.l.bf16 %v113
  %v146 = vunpack.c.l.bf16 %v114
  %v147 = vunpack.c.l.bf16 %v115
  %v148 = vunpack.c.l.bf16 %v116
  %v149 = vunpack.c.l.bf16 %v117
  %v150 = vsel %vm44, %v118, 0.0
  %151 = vadd.xlane.f32.xlu0 %v150
  %v152 = vpop.xlane.xlu0 %151
  %v153 = vsel %vm44, %v119, 0.0
  %154 = vadd.xlane.f32.xlu0 %v153
  %v155 = vpop.xlane.xlu0 %154
  %v156 = vsel %vm44, %v120, 0.0
  %157 = vadd.xlane.f32.xlu0 %v156
  %v158 = vpop.xlane.xlu0 %157
  %v159 = vsel %vm44, %v121, 0.0
  %160 = vadd.xlane.f32.xlu0 %v159
  %v161 = vpop.xlane.xlu0 %160
  %v162 = vsel %vm44, %v122, 0.0
  %163 = vadd.xlane.f32.xlu0 %v162
  %v164 = vpop.xlane.xlu0 %163
  %v165 = vsel %vm44, %v123, 0.0
  %166 = vadd.xlane.f32.xlu0 %v165
  %v167 = vpop.xlane.xlu0 %166
  %v168 = vsel %vm44, %v124, 0.0
  %169 = vadd.xlane.f32.xlu0 %v168
  %v170 = vpop.xlane.xlu0 %169
  %v171 = vsel %vm44, %v125, 0.0
  %172 = vadd.xlane.f32.xlu0 %v171
  %v173 = vpop.xlane.xlu0 %172
  %v174 = vsel %vm44, %v126, 0.0
  %175 = vadd.xlane.f32.xlu0 %v174
  %v176 = vpop.xlane.xlu0 %175
  %v177 = vsel %vm44, %v127, 0.0
  %178 = vadd.xlane.f32.xlu0 %v177
  %v179 = vpop.xlane.xlu0 %178
  %v180 = vsel %vm44, %v128, 0.0
  %181 = vadd.xlane.f32.xlu0 %v180
  %v182 = vpop.xlane.xlu0 %181
  %v183 = vsel %vm44, %v129, 0.0
  %184 = vadd.xlane.f32.xlu0 %v183
  %v185 = vpop.xlane.xlu0 %184
  %v186 = vsel %vm44, %v130, 0.0
  %187 = vadd.xlane.f32.xlu0 %v186
  %v188 = vpop.xlane.xlu0 %187
  %v189 = vsel %vm44, %v131, 0.0
  %190 = vadd.xlane.f32.xlu0 %v189
  %v191 = vpop.xlane.xlu0 %190
  %v192 = vsel %vm44, %v132, 0.0
  %193 = vadd.xlane.f32.xlu0 %v192
  %v194 = vpop.xlane.xlu0 %193
  %v195 = vsel %vm44, %v133, 0.0
  %196 = vadd.xlane.f32.xlu0 %v195
  %v197 = vpop.xlane.xlu0 %196
  %v198 = vsel %vm44, %v134, 0.0
  %199 = vadd.xlane.f32.xlu0 %v198
  %v200 = vpop.xlane.xlu0 %199
  %v201 = vsel %vm44, %v135, 0.0
  %202 = vadd.xlane.f32.xlu0 %v201
  %v203 = vpop.xlane.xlu0 %202
  %v204 = vsel %vm44, %v136, 0.0
  %205 = vadd.xlane.f32.xlu0 %v204
  %v206 = vpop.xlane.xlu0 %205
  %v207 = vsel %vm44, %v137, 0.0
  %208 = vadd.xlane.f32.xlu0 %v207
  %v209 = vpop.xlane.xlu0 %208
  %v210 = vsel %vm44, %v138, 0.0
  %211 = vadd.xlane.f32.xlu0 %v210
  %v212 = vpop.xlane.xlu0 %211
  %v213 = vsel %vm44, %v139, 0.0
  %214 = vadd.xlane.f32.xlu0 %v213
  %v215 = vpop.xlane.xlu0 %214
  %v216 = vsel %vm44, %v140, 0.0
  %217 = vadd.xlane.f32.xlu0 %v216
  %v218 = vpop.xlane.xlu0 %217
  %v219 = vsel %vm44, %v141, 0.0
  %220 = vadd.xlane.f32.xlu0 %v219
  %v221 = vpop.xlane.xlu0 %220
  %v222 = vsel %vm44, %v142, 0.0
  %223 = vadd.xlane.f32.xlu0 %v222
  %v224 = vpop.xlane.xlu0 %223
  %v225 = vsel %vm44, %v143, 0.0
  %226 = vadd.xlane.f32.xlu0 %v225
  %v227 = vpop.xlane.xlu0 %226
  %v228 = vsel %vm44, %v144, 0.0
  %229 = vadd.xlane.f32.xlu0 %v228
  %v230 = vpop.xlane.xlu0 %229
  %v231 = vsel %vm44, %v145, 0.0
  %232 = vadd.xlane.f32.xlu0 %v231
  %v233 = vpop.xlane.xlu0 %232
  %v234 = vsel %vm44, %v146, 0.0
  %235 = vadd.xlane.f32.xlu0 %v234
  %v236 = vpop.xlane.xlu0 %235
  %v237 = vsel %vm44, %v147, 0.0
  %238 = vadd.xlane.f32.xlu0 %v237
  %v239 = vpop.xlane.xlu0 %238
  %v240 = vsel %vm44, %v148, 0.0
  %241 = vadd.xlane.f32.xlu0 %v240
  %v242 = vpop.xlane.xlu0 %241
  %v243 = vsel %vm44, %v149, 0.0
  %244 = vadd.xlane.f32.xlu0 %v243
  %v245 = vpop.xlane.xlu0 %244
  %v246 = vpack.c.bf16 %v78, %v75
  %v247 = vpack.c.bf16 %v84, %v81
  %v280 = vunpack.c.l.b16 %v86
  %v281 = vunpack.c.l.b16 %v87
  %v282 = vunpack.c.l.b16 %v88
  %v283 = vunpack.c.l.b16 %v89
  %v284 = vunpack.c.l.b16 %v90
  %v285 = vunpack.c.l.b16 %v91
  %v286 = vunpack.c.l.b16 %v92
  %v287 = vunpack.c.l.b16 %v93
  %v288 = vunpack.c.l.b16 %v94
  %v289 = vunpack.c.l.b16 %v95
  %v290 = vunpack.c.l.b16 %v96
  %v291 = vunpack.c.l.b16 %v97
  %v292 = vunpack.c.l.b16 %v98
  %v293 = vunpack.c.l.b16 %v99
  %v294 = vunpack.c.l.b16 %v100
  %v295 = vunpack.c.l.b16 %v101
  %v296 = vunpack.c.l.b16 %v102
  %v297 = vunpack.c.l.b16 %v103
  %v298 = vunpack.c.l.b16 %v104
  %v299 = vunpack.c.l.b16 %v105
  %v300 = vunpack.c.l.b16 %v106
  %v301 = vunpack.c.l.b16 %v107
  %v302 = vunpack.c.l.b16 %v108
  %v303 = vunpack.c.l.b16 %v109
  %v304 = vunpack.c.l.b16 %v110
  %v305 = vunpack.c.l.b16 %v111
  %v306 = vunpack.c.l.b16 %v112
  %v307 = vunpack.c.l.b16 %v113
  %v308 = vunpack.c.l.b16 %v114
  %v309 = vunpack.c.l.b16 %v115
  %v310 = vunpack.c.l.b16 %v116
  %v311 = vunpack.c.l.b16 %v117
  %v312 = vpack.c.b16 %v281, %v280
  %v313 = vpack.c.b16 %v283, %v282
  %v314 = vpack.c.b16 %v285, %v284
  %v315 = vpack.c.b16 %v287, %v286
  %v316 = vpack.c.b16 %v289, %v288
  %v317 = vpack.c.b16 %v291, %v290
  %v318 = vpack.c.b16 %v293, %v292
  %v319 = vpack.c.b16 %v295, %v294
  %v320 = vpack.c.b16 %v297, %v296
  %v321 = vpack.c.b16 %v299, %v298
  %v322 = vpack.c.b16 %v301, %v300
  %v323 = vpack.c.b16 %v303, %v302
  %v324 = vpack.c.b16 %v305, %v304
  %v325 = vpack.c.b16 %v307, %v306
  %v326 = vpack.c.b16 %v309, %v308
  %v327 = vpack.c.b16 %v311, %v310
  %v329 = vsel %vm44, %v312, 0
  %v332 = vsel %vm44, %v313, 0
  %v335 = vsel %vm44, %v314, 0
  %v338 = vsel %vm44, %v315, 0
  %v341 = vsel %vm44, %v316, 0
  %v344 = vsel %vm44, %v317, 0
  %v347 = vsel %vm44, %v318, 0
  %v350 = vsel %vm44, %v319, 0
  %v353 = vsel %vm44, %v320, 0
  %v356 = vsel %vm44, %v321, 0
  %v359 = vsel %vm44, %v322, 0
  %v362 = vsel %vm44, %v323, 0
  %v365 = vsel %vm44, %v324, 0
  %v368 = vsel %vm44, %v325, 0
  %v371 = vsel %vm44, %v326, 0
  %v374 = vsel %vm44, %v327, 0
  %376 = vmatpush.bf16.msra.mxu0 0
  %377 = vmatpush.bf16.msra.mxu0 0
  %378 = vmatpush.bf16.msra.mxu0 0
  %379 = vmatpush.bf16.msra.mxu0 0
  %380 = vmatpush.bf16.msra.mxu0 0
  %381 = vmatpush.bf16.msra.mxu0 0
  %382 = vmatpush.bf16.msra.mxu0 %v247
  %383 = vmatpush.bf16.msra.mxu0 %v246
  %384 = vmatmul.bf16.gmra.mxu0 %v329
  %v385 = vpop.f32.mrf.mxu0
  %v386 = vadd.f32 0.0, %v385
  %v387 = vpop.f32.mrf.mxu0
  %v388 = vadd.f32 0.0, %v387
  %389 = vmatmul.bf16.gmra.mxu0 %v332
  %v390 = vpop.f32.mrf.mxu0
  %v391 = vadd.f32 0.0, %v390
  %v392 = vpop.f32.mrf.mxu0
  %v393 = vadd.f32 0.0, %v392
  %394 = vmatmul.bf16.gmra.mxu0 %v335
  %v395 = vpop.f32.mrf.mxu0
  %v396 = vadd.f32 0.0, %v395
  %v397 = vpop.f32.mrf.mxu0
  %v398 = vadd.f32 0.0, %v397
  %399 = vmatmul.bf16.gmra.mxu0 %v338
  %v400 = vpop.f32.mrf.mxu0
  %v401 = vadd.f32 0.0, %v400
  %v402 = vpop.f32.mrf.mxu0
  %v403 = vadd.f32 0.0, %v402
  %404 = vmatmul.bf16.gmra.mxu0 %v341
  %v405 = vpop.f32.mrf.mxu0
  %v406 = vadd.f32 0.0, %v405
  %v407 = vpop.f32.mrf.mxu0
  %v408 = vadd.f32 0.0, %v407
  %409 = vmatmul.bf16.gmra.mxu0 %v344
  %v410 = vpop.f32.mrf.mxu0
  %v411 = vadd.f32 0.0, %v410
  %v412 = vpop.f32.mrf.mxu0
  %v413 = vadd.f32 0.0, %v412
  %414 = vmatmul.bf16.gmra.mxu0 %v347
  %v415 = vpop.f32.mrf.mxu0
  %v416 = vadd.f32 0.0, %v415
  %v417 = vpop.f32.mrf.mxu0
  %v418 = vadd.f32 0.0, %v417
  %419 = vmatmul.bf16.gmra.mxu0 %v350
  %v420 = vpop.f32.mrf.mxu0
  %v421 = vadd.f32 0.0, %v420
  %v422 = vpop.f32.mrf.mxu0
  %v423 = vadd.f32 0.0, %v422
  %424 = vmatmul.bf16.gmra.mxu0 %v353
  %v425 = vpop.f32.mrf.mxu0
  %v426 = vadd.f32 0.0, %v425
  %v427 = vpop.f32.mrf.mxu0
  %v428 = vadd.f32 0.0, %v427
  %429 = vmatmul.bf16.gmra.mxu0 %v356
  %v430 = vpop.f32.mrf.mxu0
  %v431 = vadd.f32 0.0, %v430
  %v432 = vpop.f32.mrf.mxu0
  %v433 = vadd.f32 0.0, %v432
  %434 = vmatmul.bf16.gmra.mxu0 %v359
  %v435 = vpop.f32.mrf.mxu0
  %v436 = vadd.f32 0.0, %v435
  %v437 = vpop.f32.mrf.mxu0
  %v438 = vadd.f32 0.0, %v437
  %439 = vmatmul.bf16.gmra.mxu0 %v362
  %v440 = vpop.f32.mrf.mxu0
  %v441 = vadd.f32 0.0, %v440
  %v442 = vpop.f32.mrf.mxu0
  %v443 = vadd.f32 0.0, %v442
  %444 = vmatmul.bf16.gmra.mxu0 %v365
  %v445 = vpop.f32.mrf.mxu0
  %v446 = vadd.f32 0.0, %v445
  %v447 = vpop.f32.mrf.mxu0
  %v448 = vadd.f32 0.0, %v447
  %449 = vmatmul.bf16.gmra.mxu0 %v368
  %v450 = vpop.f32.mrf.mxu0
  %v451 = vadd.f32 0.0, %v450
  %v452 = vpop.f32.mrf.mxu0
  %v453 = vadd.f32 0.0, %v452
  %454 = vmatmul.bf16.gmra.mxu0 %v371
  %v455 = vpop.f32.mrf.mxu0
  %v456 = vadd.f32 0.0, %v455
  %v457 = vpop.f32.mrf.mxu0
  %v458 = vadd.f32 0.0, %v457
  %459 = vmatmul.bf16.gmra.mxu0 %v374
  %v460 = vpop.f32.mrf.mxu0
  %v461 = vadd.f32 0.0, %v460
  %v462 = vpop.f32.mrf.mxu0
  %v463 = vadd.f32 0.0, %v462
  %464 = vdwg.mxu0
  %v465 = vrcp.pop %v152
  %v466 = vrcp.pop %v155
  %v467 = vrcp.pop %v158
  %v468 = vrcp.pop %v161
  %v469 = vrcp.pop %v164
  %v470 = vrcp.pop %v167
  %v471 = vrcp.pop %v170
  %v472 = vrcp.pop %v173
  %v473 = vrcp.pop %v176
  %v474 = vrcp.pop %v179
  %v475 = vrcp.pop %v182
  %v476 = vrcp.pop %v185
  %v477 = vrcp.pop %v188
  %v478 = vrcp.pop %v191
  %v479 = vrcp.pop %v194
  %v480 = vrcp.pop %v197
  %v481 = vrcp.pop %v200
  %v482 = vrcp.pop %v203
  %v483 = vrcp.pop %v206
  %v484 = vrcp.pop %v209
  %v485 = vrcp.pop %v212
  %v486 = vrcp.pop %v215
  %v487 = vrcp.pop %v218
  %v488 = vrcp.pop %v221
  %v489 = vrcp.pop %v224
  %v490 = vrcp.pop %v227
  %v491 = vrcp.pop %v230
  %v492 = vrcp.pop %v233
  %v493 = vrcp.pop %v236
  %v494 = vrcp.pop %v239
  %v495 = vrcp.pop %v242
  %v496 = vrcp.pop %v245
  %v497 = vmul.f32 %v386, %v465
  %v498 = vmul.f32 %v388, %v466
  %v499 = vmul.f32 %v391, %v467
  %v500 = vmul.f32 %v393, %v468
  %v501 = vmul.f32 %v396, %v469
  %v502 = vmul.f32 %v398, %v470
  %v503 = vmul.f32 %v401, %v471
  %v504 = vmul.f32 %v403, %v472
  %v505 = vmul.f32 %v406, %v473
  %v506 = vmul.f32 %v408, %v474
  %v507 = vmul.f32 %v411, %v475
  %v508 = vmul.f32 %v413, %v476
  %v509 = vmul.f32 %v416, %v477
  %v510 = vmul.f32 %v418, %v478
  %v511 = vmul.f32 %v421, %v479
  %v512 = vmul.f32 %v423, %v480
  %v513 = vmul.f32 %v426, %v481
  %v514 = vmul.f32 %v428, %v482
  %v515 = vmul.f32 %v431, %v483
  %v516 = vmul.f32 %v433, %v484
  %v517 = vmul.f32 %v436, %v485
  %v518 = vmul.f32 %v438, %v486
  %v519 = vmul.f32 %v441, %v487
  %v520 = vmul.f32 %v443, %v488
  %v521 = vmul.f32 %v446, %v489
  %v522 = vmul.f32 %v448, %v490
  %v523 = vmul.f32 %v451, %v491
  %v524 = vmul.f32 %v453, %v492
  %v525 = vmul.f32 %v456, %v493
  %v526 = vmul.f32 %v458, %v494
  %v527 = vmul.f32 %v461, %v495
  %v528 = vmul.f32 %v463, %v496
  %v529 = vmax.f32 %v497, 0.0
  %v530 = vmax.f32 %v498, 0.0
  %v531 = vmax.f32 %v499, 0.0
  %v532 = vmax.f32 %v500, 0.0
  %v533 = vmax.f32 %v501, 0.0
  %v534 = vmax.f32 %v502, 0.0
  %v535 = vmax.f32 %v503, 0.0
  %v536 = vmax.f32 %v504, 0.0
  %v537 = vmax.f32 %v505, 0.0
  %v538 = vmax.f32 %v506, 0.0
  %v539 = vmax.f32 %v507, 0.0
  %v540 = vmax.f32 %v508, 0.0
  %v541 = vmax.f32 %v509, 0.0
  %v542 = vmax.f32 %v510, 0.0
  %v543 = vmax.f32 %v511, 0.0
  %v544 = vmax.f32 %v512, 0.0
  %v545 = vmax.f32 %v513, 0.0
  %v546 = vmax.f32 %v514, 0.0
  %v547 = vmax.f32 %v515, 0.0
  %v548 = vmax.f32 %v516, 0.0
  %v549 = vmax.f32 %v517, 0.0
  %v550 = vmax.f32 %v518, 0.0
  %v551 = vmax.f32 %v519, 0.0
  %v552 = vmax.f32 %v520, 0.0
  %v553 = vmax.f32 %v521, 0.0
  %v554 = vmax.f32 %v522, 0.0
  %v555 = vmax.f32 %v523, 0.0
  %v556 = vmax.f32 %v524, 0.0
  %v557 = vmax.f32 %v525, 0.0
  %v558 = vmax.f32 %v526, 0.0
  %v559 = vmax.f32 %v527, 0.0
  %v560 = vmax.f32 %v528, 0.0
  %vm561 = vcmask 130048
  %562 = vst.msk [vmem:[%s9] sm:$0xff] %vm561, %v529
  %563 = vst.msk [vmem:[%s9 + $0x8] sm:$0xff] %vm561, %v530
  %564 = vst.msk [vmem:[%s9 + $0x10] sm:$0xff] %vm561, %v531
  %565 = vst.msk [vmem:[%s9 + $0x18] sm:$0xff] %vm561, %v532
  %566 = vst.msk [vmem:[%s9 + $0x20] sm:$0xff] %vm561, %v533
  %567 = vst.msk [vmem:[%s9 + $0x28] sm:$0xff] %vm561, %v534
  %568 = vst.msk [vmem:[%s9 + $0x30] sm:$0xff] %vm561, %v535
  %569 = vst.msk [vmem:[%s9 + $0x38] sm:$0xff] %vm561, %v536
  %570 = vst.msk [vmem:[%s9 + $0x40] sm:$0xff] %vm561, %v537
  %571 = vst.msk [vmem:[%s9 + $0x48] sm:$0xff] %vm561, %v538
  %572 = vst.msk [vmem:[%s9 + $0x50] sm:$0xff] %vm561, %v539
  %573 = vst.msk [vmem:[%s9 + $0x58] sm:$0xff] %vm561, %v540
  %574 = vst.msk [vmem:[%s9 + $0x60] sm:$0xff] %vm561, %v541
  %575 = vst.msk [vmem:[%s9 + $0x68] sm:$0xff] %vm561, %v542
  %576 = vst.msk [vmem:[%s9 + $0x70] sm:$0xff] %vm561, %v543
  %577 = vst.msk [vmem:[%s9 + $0x78] sm:$0xff] %vm561, %v544
  %578 = vst.msk [vmem:[%s9 + $0x80] sm:$0xff] %vm561, %v545
  %579 = vst.msk [vmem:[%s9 + $0x88] sm:$0xff] %vm561, %v546
  %580 = vst.msk [vmem:[%s9 + $0x90] sm:$0xff] %vm561, %v547
  %581 = vst.msk [vmem:[%s9 + $0x98] sm:$0xff] %vm561, %v548
  %582 = vst.msk [vmem:[%s9 + $0xa0] sm:$0xff] %vm561, %v549
  %583 = vst.msk [vmem:[%s9 + $0xa8] sm:$0xff] %vm561, %v550
  %584 = vst.msk [vmem:[%s9 + $0xb0] sm:$0xff] %vm561, %v551
  %585 = vst.msk [vmem:[%s9 + $0xb8] sm:$0xff] %vm561, %v552
  %586 = vst.msk [vmem:[%s9 + $0xc0] sm:$0xff] %vm561, %v553
  %587 = vst.msk [vmem:[%s9 + $0xc8] sm:$0xff] %vm561, %v554
  %588 = vst.msk [vmem:[%s9 + $0xd0] sm:$0xff] %vm561, %v555
  %589 = vst.msk [vmem:[%s9 + $0xd8] sm:$0xff] %vm561, %v556
  %590 = vst.msk [vmem:[%s9 + $0xe0] sm:$0xff] %vm561, %v557
  %591 = vst.msk [vmem:[%s9 + $0xe8] sm:$0xff] %vm561, %v558
  %592 = vst.msk [vmem:[%s9 + $0xf0] sm:$0xff] %vm561, %v559
  %593 = vst.msk [vmem:[%s9 + $0xf8] sm:$0xff] %vm561, %v560
  %v594 = vpack.c.bf16 %v530, %v529
  %v595 = vpack.c.bf16 %v532, %v531
  %v596 = vpack.c.bf16 %v534, %v533
  %v597 = vpack.c.bf16 %v536, %v535
  %v598 = vpack.c.bf16 %v538, %v537
  %v599 = vpack.c.bf16 %v540, %v539
  %v600 = vpack.c.bf16 %v542, %v541
  %v601 = vpack.c.bf16 %v544, %v543
  %v602 = vpack.c.bf16 %v546, %v545
  %v603 = vpack.c.bf16 %v548, %v547
  %v604 = vpack.c.bf16 %v550, %v549
  %v605 = vpack.c.bf16 %v552, %v551
  %v606 = vpack.c.bf16 %v554, %v553
  %v607 = vpack.c.bf16 %v556, %v555
  %v608 = vpack.c.bf16 %v558, %v557
  %v609 = vpack.c.bf16 %v560, %v559
  %v610 = vld [vmem:[%s3] sm:$0xff]
  %v611 = vld [vmem:[%s3 + $0x8] sm:$0xff]
  %v612 = vpack.c.bf16 %v611, %v610
  %v614 = vsel %vm561, %v594, 0
  %v617 = vsel %vm561, %v595, 0
  %v620 = vsel %vm561, %v596, 0
  %v623 = vsel %vm561, %v597, 0
  %v626 = vsel %vm561, %v598, 0
  %v629 = vsel %vm561, %v599, 0
  %v632 = vsel %vm561, %v600, 0
  %v635 = vsel %vm561, %v601, 0
  %v638 = vsel %vm561, %v602, 0
  %v641 = vsel %vm561, %v603, 0
  %v644 = vsel %vm561, %v604, 0
  %v647 = vsel %vm561, %v605, 0
  %v650 = vsel %vm561, %v606, 0
  %v653 = vsel %vm561, %v607, 0
  %v656 = vsel %vm561, %v608, 0
  %v659 = vsel %vm561, %v609, 0
  %661 = vmatpush.bf16.msra.mxu0 0
  %662 = vmatpush.bf16.msra.mxu0 0
  %663 = vmatpush.bf16.msra.mxu0 0
  %664 = vmatpush.bf16.msra.mxu0 0
  %665 = vmatpush.bf16.msra.mxu0 0
  %666 = vmatpush.bf16.msra.mxu0 0
  %667 = vmatpush.bf16.msra.mxu0 0
  %668 = vmatpush.bf16.msra.mxu0 %v612
  %669 = vmatmul.bf16.gmra.mxu0 %v614
  %v670 = vpop.f32.mrf.mxu0
  %v671 = vadd.f32 0.0, %v670
  %v672 = vpop.f32.mrf.mxu0
  %v673 = vadd.f32 0.0, %v672
  %674 = vmatmul.bf16.gmra.mxu0 %v617
  %v675 = vpop.f32.mrf.mxu0
  %v676 = vadd.f32 0.0, %v675
  %v677 = vpop.f32.mrf.mxu0
  %v678 = vadd.f32 0.0, %v677
  %679 = vmatmul.bf16.gmra.mxu0 %v620
  %v680 = vpop.f32.mrf.mxu0
  %v681 = vadd.f32 0.0, %v680
  %v682 = vpop.f32.mrf.mxu0
  %v683 = vadd.f32 0.0, %v682
  %684 = vmatmul.bf16.gmra.mxu0 %v623
  %v685 = vpop.f32.mrf.mxu0
  %v686 = vadd.f32 0.0, %v685
  %v687 = vpop.f32.mrf.mxu0
  %v688 = vadd.f32 0.0, %v687
  %689 = vmatmul.bf16.gmra.mxu0 %v626
  %v690 = vpop.f32.mrf.mxu0
  %v691 = vadd.f32 0.0, %v690
  %v692 = vpop.f32.mrf.mxu0
  %v693 = vadd.f32 0.0, %v692
  %694 = vmatmul.bf16.gmra.mxu0 %v629
  %v695 = vpop.f32.mrf.mxu0
  %v696 = vadd.f32 0.0, %v695
  %v697 = vpop.f32.mrf.mxu0
  %v698 = vadd.f32 0.0, %v697
  %699 = vmatmul.bf16.gmra.mxu0 %v632
  %v700 = vpop.f32.mrf.mxu0
  %v701 = vadd.f32 0.0, %v700
  %v702 = vpop.f32.mrf.mxu0
  %v703 = vadd.f32 0.0, %v702
  %704 = vmatmul.bf16.gmra.mxu0 %v635
  %v705 = vpop.f32.mrf.mxu0
  %v706 = vadd.f32 0.0, %v705
  %v707 = vpop.f32.mrf.mxu0
  %v708 = vadd.f32 0.0, %v707
  %709 = vmatmul.bf16.gmra.mxu0 %v638
  %v710 = vpop.f32.mrf.mxu0
  %v711 = vadd.f32 0.0, %v710
  %v712 = vpop.f32.mrf.mxu0
  %v713 = vadd.f32 0.0, %v712
  %714 = vmatmul.bf16.gmra.mxu0 %v641
  %v715 = vpop.f32.mrf.mxu0
  %v716 = vadd.f32 0.0, %v715
  %v717 = vpop.f32.mrf.mxu0
  %v718 = vadd.f32 0.0, %v717
  %719 = vmatmul.bf16.gmra.mxu0 %v644
  %v720 = vpop.f32.mrf.mxu0
  %v721 = vadd.f32 0.0, %v720
  %v722 = vpop.f32.mrf.mxu0
  %v723 = vadd.f32 0.0, %v722
  %724 = vmatmul.bf16.gmra.mxu0 %v647
  %v725 = vpop.f32.mrf.mxu0
  %v726 = vadd.f32 0.0, %v725
  %v727 = vpop.f32.mrf.mxu0
  %v728 = vadd.f32 0.0, %v727
  %729 = vmatmul.bf16.gmra.mxu0 %v650
  %v730 = vpop.f32.mrf.mxu0
  %v731 = vadd.f32 0.0, %v730
  %v732 = vpop.f32.mrf.mxu0
  %v733 = vadd.f32 0.0, %v732
  %734 = vmatmul.bf16.gmra.mxu0 %v653
  %v735 = vpop.f32.mrf.mxu0
  %v736 = vadd.f32 0.0, %v735
  %v737 = vpop.f32.mrf.mxu0
  %v738 = vadd.f32 0.0, %v737
  %739 = vmatmul.bf16.gmra.mxu0 %v656
  %v740 = vpop.f32.mrf.mxu0
  %v741 = vadd.f32 0.0, %v740
  %v742 = vpop.f32.mrf.mxu0
  %v743 = vadd.f32 0.0, %v742
  %744 = vmatmul.bf16.gmra.mxu0 %v659
  %v745 = vpop.f32.mrf.mxu0
  %v746 = vadd.f32 0.0, %v745
  %v747 = vpop.f32.mrf.mxu0
  %v748 = vadd.f32 0.0, %v747
  %749 = vdwg.mxu0
  %v750 = vpack.c.bf16 %v673, %v671
  %v751 = vpack.c.bf16 %v678, %v676
  %v752 = vpack.c.bf16 %v683, %v681
  %v753 = vpack.c.bf16 %v688, %v686
  %v754 = vpack.c.bf16 %v693, %v691
  %v755 = vpack.c.bf16 %v698, %v696
  %v756 = vpack.c.bf16 %v703, %v701
  %v757 = vpack.c.bf16 %v708, %v706
  %v758 = vpack.c.bf16 %v713, %v711
  %v759 = vpack.c.bf16 %v718, %v716
  %v760 = vpack.c.bf16 %v723, %v721
  %v761 = vpack.c.bf16 %v728, %v726
  %v762 = vpack.c.bf16 %v733, %v731
  %v763 = vpack.c.bf16 %v738, %v736
  %v764 = vpack.c.bf16 %v743, %v741
  %v765 = vpack.c.bf16 %v748, %v746
  %782 = vrot.lane.b32.xlu0 %v750, 112
  %v783 = vpop.permute.xlu0 %782
  %784 = vrot.lane.b32.xlu0 %v751, 112
  %v785 = vpop.permute.xlu0 %784
  %786 = vrot.lane.b32.xlu0 %v752, 112
  %v787 = vpop.permute.xlu0 %786
  %788 = vrot.lane.b32.xlu0 %v753, 112
  %v789 = vpop.permute.xlu0 %788
  %790 = vrot.lane.b32.xlu0 %v754, 112
  %v791 = vpop.permute.xlu0 %790
  %792 = vrot.lane.b32.xlu0 %v755, 112
  %v793 = vpop.permute.xlu0 %792
  %794 = vrot.lane.b32.xlu0 %v756, 112
  %v795 = vpop.permute.xlu0 %794
  %796 = vrot.lane.b32.xlu0 %v757, 112
  %v797 = vpop.permute.xlu0 %796
  %798 = vrot.lane.b32.xlu0 %v758, 112
  %v799 = vpop.permute.xlu0 %798
  %800 = vrot.lane.b32.xlu0 %v759, 112
  %v801 = vpop.permute.xlu0 %800
  %802 = vrot.lane.b32.xlu0 %v760, 112
  %v803 = vpop.permute.xlu0 %802
  %804 = vrot.lane.b32.xlu0 %v761, 112
  %v805 = vpop.permute.xlu0 %804
  %806 = vrot.lane.b32.xlu0 %v762, 112
  %v807 = vpop.permute.xlu0 %806
  %808 = vrot.lane.b32.xlu0 %v763, 112
  %v809 = vpop.permute.xlu0 %808
  %810 = vrot.lane.b32.xlu0 %v764, 112
  %v811 = vpop.permute.xlu0 %810
  %812 = vrot.lane.b32.xlu0 %v765, 112
  %v813 = vpop.permute.xlu0 %812
  %v815 = vsel %vm561, %v750, 0
  %v818 = vsel %vm561, %v751, 0
  %v821 = vsel %vm561, %v752, 0
  %v824 = vsel %vm561, %v753, 0
  %v827 = vsel %vm561, %v754, 0
  %v830 = vsel %vm561, %v755, 0
  %v833 = vsel %vm561, %v756, 0
  %v836 = vsel %vm561, %v757, 0
  %v839 = vsel %vm561, %v758, 0
  %v842 = vsel %vm561, %v759, 0
  %v845 = vsel %vm561, %v760, 0
  %v848 = vsel %vm561, %v761, 0
  %v851 = vsel %vm561, %v762, 0
  %v854 = vsel %vm561, %v763, 0
  %v857 = vsel %vm561, %v764, 0
  %v860 = vsel %vm561, %v765, 0
  %v863 = vsel %vm561, %v783, 0
  %v866 = vsel %vm561, %v785, 0
  %v869 = vsel %vm561, %v787, 0
  %v872 = vsel %vm561, %v789, 0
  %v875 = vsel %vm561, %v791, 0
  %v878 = vsel %vm561, %v793, 0
  %v881 = vsel %vm561, %v795, 0
  %v884 = vsel %vm561, %v797, 0
  %v887 = vsel %vm561, %v799, 0
  %v890 = vsel %vm561, %v801, 0
  %v893 = vsel %vm561, %v803, 0
  %v896 = vsel %vm561, %v805, 0
  %v899 = vsel %vm561, %v807, 0
  %v902 = vsel %vm561, %v809, 0
  %v905 = vsel %vm561, %v811, 0
  %v908 = vsel %vm561, %v813, 0
  %910 = vmatpush.bf16.xpose.msra.mxu0 %v884
  %911 = vmatpush.bf16.xpose.msra.mxu0 %v881
  %912 = vmatpush.bf16.xpose.msra.mxu0 %v878
  %913 = vmatpush.bf16.xpose.msra.mxu0 %v875
  %914 = vmatpush.bf16.xpose.msra.mxu0 %v872
  %915 = vmatpush.bf16.xpose.msra.mxu0 %v869
  %916 = vmatpush.bf16.xpose.msra.mxu0 %v866
  %917 = vmatpush.bf16.xpose.msra.mxu0 %v863
  %918 = vmatmul.bf16.gmra.mxu0 %v815
  %v919 = vpop.f32.mrf.mxu0
  %v920 = vadd.f32 0.0, %v919
  %v921 = vpop.f32.mrf.mxu0
  %v922 = vadd.f32 0.0, %v921
  %923 = vmatmul.bf16.gmra.mxu0 %v818
  %v924 = vpop.f32.mrf.mxu0
  %v925 = vadd.f32 0.0, %v924
  %v926 = vpop.f32.mrf.mxu0
  %v927 = vadd.f32 0.0, %v926
  %928 = vmatmul.bf16.gmra.mxu0 %v821
  %v929 = vpop.f32.mrf.mxu0
  %v930 = vadd.f32 0.0, %v929
  %v931 = vpop.f32.mrf.mxu0
  %v932 = vadd.f32 0.0, %v931
  %933 = vmatmul.bf16.gmra.mxu0 %v824
  %v934 = vpop.f32.mrf.mxu0
  %v935 = vadd.f32 0.0, %v934
  %v936 = vpop.f32.mrf.mxu0
  %v937 = vadd.f32 0.0, %v936
  %938 = vmatmul.bf16.gmra.mxu0 %v827
  %v939 = vpop.f32.mrf.mxu0
  %v940 = vadd.f32 0.0, %v939
  %v941 = vpop.f32.mrf.mxu0
  %v942 = vadd.f32 0.0, %v941
  %943 = vmatmul.bf16.gmra.mxu0 %v830
  %v944 = vpop.f32.mrf.mxu0
  %v945 = vadd.f32 0.0, %v944
  %v946 = vpop.f32.mrf.mxu0
  %v947 = vadd.f32 0.0, %v946
  %948 = vmatmul.bf16.gmra.mxu0 %v833
  %v949 = vpop.f32.mrf.mxu0
  %v950 = vadd.f32 0.0, %v949
  %v951 = vpop.f32.mrf.mxu0
  %v952 = vadd.f32 0.0, %v951
  %953 = vmatmul.bf16.gmra.mxu0 %v836
  %v954 = vpop.f32.mrf.mxu0
  %v955 = vadd.f32 0.0, %v954
  %v956 = vpop.f32.mrf.mxu0
  %v957 = vadd.f32 0.0, %v956
  %958 = vmatmul.bf16.gmra.mxu0 %v839
  %v959 = vpop.f32.mrf.mxu0
  %v960 = vadd.f32 0.0, %v959
  %v961 = vpop.f32.mrf.mxu0
  %v962 = vadd.f32 0.0, %v961
  %963 = vmatmul.bf16.gmra.mxu0 %v842
  %v964 = vpop.f32.mrf.mxu0
  %v965 = vadd.f32 0.0, %v964
  %v966 = vpop.f32.mrf.mxu0
  %v967 = vadd.f32 0.0, %v966
  %968 = vmatmul.bf16.gmra.mxu0 %v845
  %v969 = vpop.f32.mrf.mxu0
  %v970 = vadd.f32 0.0, %v969
  %v971 = vpop.f32.mrf.mxu0
  %v972 = vadd.f32 0.0, %v971
  %973 = vmatmul.bf16.gmra.mxu0 %v848
  %v974 = vpop.f32.mrf.mxu0
  %v975 = vadd.f32 0.0, %v974
  %v976 = vpop.f32.mrf.mxu0
  %v977 = vadd.f32 0.0, %v976
  %978 = vmatmul.bf16.gmra.mxu0 %v851
  %v979 = vpop.f32.mrf.mxu0
  %v980 = vadd.f32 0.0, %v979
  %v981 = vpop.f32.mrf.mxu0
  %v982 = vadd.f32 0.0, %v981
  %983 = vmatmul.bf16.gmra.mxu0 %v854
  %v984 = vpop.f32.mrf.mxu0
  %v985 = vadd.f32 0.0, %v984
  %v986 = vpop.f32.mrf.mxu0
  %v987 = vadd.f32 0.0, %v986
  %988 = vmatmul.bf16.gmra.mxu0 %v857
  %v989 = vpop.f32.mrf.mxu0
  %v990 = vadd.f32 0.0, %v989
  %v991 = vpop.f32.mrf.mxu0
  %v992 = vadd.f32 0.0, %v991
  %993 = vmatmul.bf16.gmra.mxu0 %v860
  %v994 = vpop.f32.mrf.mxu0
  %v995 = vadd.f32 0.0, %v994
  %v996 = vpop.f32.mrf.mxu0
  %v997 = vadd.f32 0.0, %v996
  %998 = vdwg.mxu0
  %999 = vmatpush.bf16.xpose.msra.mxu0 %v908
  %1000 = vmatpush.bf16.xpose.msra.mxu0 %v905
  %1001 = vmatpush.bf16.xpose.msra.mxu0 %v902
  %1002 = vmatpush.bf16.xpose.msra.mxu0 %v899
  %1003 = vmatpush.bf16.xpose.msra.mxu0 %v896
  %1004 = vmatpush.bf16.xpose.msra.mxu0 %v893
  %1005 = vmatpush.bf16.xpose.msra.mxu0 %v890
  %1006 = vmatpush.bf16.xpose.msra.mxu0 %v887
  %1007 = vmatmul.bf16.gmra.mxu0 %v815
  %v1008 = vpop.f32.mrf.mxu0
  %v1009 = vadd.f32 0.0, %v1008
  %v1010 = vpop.f32.mrf.mxu0
  %v1011 = vadd.f32 0.0, %v1010
  %1012 = vmatmul.bf16.gmra.mxu0 %v818
  %v1013 = vpop.f32.mrf.mxu0
  %v1014 = vadd.f32 0.0, %v1013
  %v1015 = vpop.f32.mrf.mxu0
  %v1016 = vadd.f32 0.0, %v1015
  %1017 = vmatmul.bf16.gmra.mxu0 %v821
  %v1018 = vpop.f32.mrf.mxu0
  %v1019 = vadd.f32 0.0, %v1018
  %v1020 = vpop.f32.mrf.mxu0
  %v1021 = vadd.f32 0.0, %v1020
  %1022 = vmatmul.bf16.gmra.mxu0 %v824
  %v1023 = vpop.f32.mrf.mxu0
  %v1024 = vadd.f32 0.0, %v1023
  %v1025 = vpop.f32.mrf.mxu0
  %v1026 = vadd.f32 0.0, %v1025
  %1027 = vmatmul.bf16.gmra.mxu0 %v827
  %v1028 = vpop.f32.mrf.mxu0
  %v1029 = vadd.f32 0.0, %v1028
  %v1030 = vpop.f32.mrf.mxu0
  %v1031 = vadd.f32 0.0, %v1030
  %1032 = vmatmul.bf16.gmra.mxu0 %v830
  %v1033 = vpop.f32.mrf.mxu0
  %v1034 = vadd.f32 0.0, %v1033
  %v1035 = vpop.f32.mrf.mxu0
  %v1036 = vadd.f32 0.0, %v1035
  %1037 = vmatmul.bf16.gmra.mxu0 %v833
  %v1038 = vpop.f32.mrf.mxu0
  %v1039 = vadd.f32 0.0, %v1038
  %v1040 = vpop.f32.mrf.mxu0
  %v1041 = vadd.f32 0.0, %v1040
  %1042 = vmatmul.bf16.gmra.mxu0 %v836
  %v1043 = vpop.f32.mrf.mxu0
  %v1044 = vadd.f32 0.0, %v1043
  %v1045 = vpop.f32.mrf.mxu0
  %v1046 = vadd.f32 0.0, %v1045
  %1047 = vmatmul.bf16.gmra.mxu0 %v839
  %v1048 = vpop.f32.mrf.mxu0
  %v1049 = vadd.f32 0.0, %v1048
  %v1050 = vpop.f32.mrf.mxu0
  %v1051 = vadd.f32 0.0, %v1050
  %1052 = vmatmul.bf16.gmra.mxu0 %v842
  %v1053 = vpop.f32.mrf.mxu0
  %v1054 = vadd.f32 0.0, %v1053
  %v1055 = vpop.f32.mrf.mxu0
  %v1056 = vadd.f32 0.0, %v1055
  %1057 = vmatmul.bf16.gmra.mxu0 %v845
  %v1058 = vpop.f32.mrf.mxu0
  %v1059 = vadd.f32 0.0, %v1058
  %v1060 = vpop.f32.mrf.mxu0
  %v1061 = vadd.f32 0.0, %v1060
  %1062 = vmatmul.bf16.gmra.mxu0 %v848
  %v1063 = vpop.f32.mrf.mxu0
  %v1064 = vadd.f32 0.0, %v1063
  %v1065 = vpop.f32.mrf.mxu0
  %v1066 = vadd.f32 0.0, %v1065
  %1067 = vmatmul.bf16.gmra.mxu0 %v851
  %v1068 = vpop.f32.mrf.mxu0
  %v1069 = vadd.f32 0.0, %v1068
  %v1070 = vpop.f32.mrf.mxu0
  %v1071 = vadd.f32 0.0, %v1070
  %1072 = vmatmul.bf16.gmra.mxu0 %v854
  %v1073 = vpop.f32.mrf.mxu0
  %v1074 = vadd.f32 0.0, %v1073
  %v1075 = vpop.f32.mrf.mxu0
  %v1076 = vadd.f32 0.0, %v1075
  %1077 = vmatmul.bf16.gmra.mxu0 %v857
  %v1078 = vpop.f32.mrf.mxu0
  %v1079 = vadd.f32 0.0, %v1078
  %v1080 = vpop.f32.mrf.mxu0
  %v1081 = vadd.f32 0.0, %v1080
  %1082 = vmatmul.bf16.gmra.mxu0 %v860
  %v1083 = vpop.f32.mrf.mxu0
  %v1084 = vadd.f32 0.0, %v1083
  %v1085 = vpop.f32.mrf.mxu0
  %v1086 = vadd.f32 0.0, %v1085
  %1087 = vdwg.mxu0
  %v1088 = vmul.f32 %v920, 0.25
  %v1089 = vmul.f32 %v1009, 0.25
  %v1090 = vmul.f32 %v922, 0.25
  %v1091 = vmul.f32 %v1011, 0.25
  %v1092 = vmul.f32 %v925, 0.25
  %v1093 = vmul.f32 %v1014, 0.25
  %v1094 = vmul.f32 %v927, 0.25
  %v1095 = vmul.f32 %v1016, 0.25
  %v1096 = vmul.f32 %v930, 0.25
  %v1097 = vmul.f32 %v1019, 0.25
  %v1098 = vmul.f32 %v932, 0.25
  %v1099 = vmul.f32 %v1021, 0.25
  %v1100 = vmul.f32 %v935, 0.25
  %v1101 = vmul.f32 %v1024, 0.25
  %v1102 = vmul.f32 %v937, 0.25
  %v1103 = vmul.f32 %v1026, 0.25
  %v1104 = vmul.f32 %v940, 0.25
  %v1105 = vmul.f32 %v1029, 0.25
  %v1106 = vmul.f32 %v942, 0.25
  %v1107 = vmul.f32 %v1031, 0.25
  %v1108 = vmul.f32 %v945, 0.25
  %v1109 = vmul.f32 %v1034, 0.25
  %v1110 = vmul.f32 %v947, 0.25
  %v1111 = vmul.f32 %v1036, 0.25
  %v1112 = vmul.f32 %v950, 0.25
  %v1113 = vmul.f32 %v1039, 0.25
  %v1114 = vmul.f32 %v952, 0.25
  %v1115 = vmul.f32 %v1041, 0.25
  %v1116 = vmul.f32 %v955, 0.25
  %v1117 = vmul.f32 %v1044, 0.25
  %v1118 = vmul.f32 %v957, 0.25
  %v1119 = vmul.f32 %v1046, 0.25
  %v1120 = vmul.f32 %v960, 0.25
  %v1121 = vmul.f32 %v1049, 0.25
  %v1122 = vmul.f32 %v962, 0.25
  %v1123 = vmul.f32 %v1051, 0.25
  %v1124 = vmul.f32 %v965, 0.25
  %v1125 = vmul.f32 %v1054, 0.25
  %v1126 = vmul.f32 %v967, 0.25
  %v1127 = vmul.f32 %v1056, 0.25
  %v1128 = vmul.f32 %v970, 0.25
  %v1129 = vmul.f32 %v1059, 0.25
  %v1130 = vmul.f32 %v972, 0.25
  %v1131 = vmul.f32 %v1061, 0.25
  %v1132 = vmul.f32 %v975, 0.25
  %v1133 = vmul.f32 %v1064, 0.25
  %v1134 = vmul.f32 %v977, 0.25
  %v1135 = vmul.f32 %v1066, 0.25
  %v1136 = vmul.f32 %v980, 0.25
  %v1137 = vmul.f32 %v1069, 0.25
  %v1138 = vmul.f32 %v982, 0.25
  %v1139 = vmul.f32 %v1071, 0.25
  %v1140 = vmul.f32 %v985, 0.25
  %v1141 = vmul.f32 %v1074, 0.25
  %v1142 = vmul.f32 %v987, 0.25
  %v1143 = vmul.f32 %v1076, 0.25
  %v1144 = vmul.f32 %v990, 0.25
  %v1145 = vmul.f32 %v1079, 0.25
  %v1146 = vmul.f32 %v992, 0.25
  %v1147 = vmul.f32 %v1081, 0.25
  %v1148 = vmul.f32 %v995, 0.25
  %v1149 = vmul.f32 %v1084, 0.25
  %v1150 = vmul.f32 %v997, 0.25
  %v1151 = vmul.f32 %v1086, 0.25
  %v1152 = vlaneseq
  %v1153 = vshrl.u32 %v1152, 7
  %v1154 = vadd.s32 %v1153, 8
  %v1155 = vadd.s32 %v1153, 16
  %v1156 = vadd.s32 %v1153, 24
  %v1157 = vadd.s32 %v1153, 32
  %v1158 = vadd.s32 %v1153, 40
  %v1159 = vadd.s32 %v1153, 48
  %v1160 = vadd.s32 %v1153, 56
  %v1161 = vadd.s32 %v1153, 64
  %v1162 = vadd.s32 %v1153, 72
  %v1163 = vadd.s32 %v1153, 80
  %v1164 = vadd.s32 %v1153, 88
  %v1165 = vadd.s32 %v1153, 96
  %v1166 = vadd.s32 %v1153, 104
  %v1167 = vadd.s32 %v1153, 112
  %v1168 = vadd.s32 %v1153, 120
  %v1169 = vadd.s32 %v1153, 128
  %v1170 = vadd.s32 %v1153, 136
  %v1171 = vadd.s32 %v1153, 144
  %v1172 = vadd.s32 %v1153, 152
  %v1173 = vadd.s32 %v1153, 160
  %v1174 = vadd.s32 %v1153, 168
  %v1175 = vadd.s32 %v1153, 176
  %v1176 = vadd.s32 %v1153, 184
  %v1177 = vadd.s32 %v1153, 192
  %v1178 = vadd.s32 %v1153, 200
  %v1179 = vadd.s32 %v1153, 208
  %v1180 = vadd.s32 %v1153, 216
  %v1181 = vadd.s32 %v1153, 224
  %v1182 = vadd.s32 %v1153, 232
  %v1183 = vadd.s32 %v1153, 240
  %v1184 = vadd.s32 %v1153, 248
  %v1185 = vlaneseq
  %v1186 = vand.u32 %v1185, 127
  %v1187 = vadd.s32 %v1186, 128
  %v1188 = vshra.s32 %v1153, 3
  %v1189 = vshra.s32 %v1154, 3
  %v1190 = vshra.s32 %v1155, 3
  %v1191 = vshra.s32 %v1156, 3
  %v1192 = vshra.s32 %v1157, 3
  %v1193 = vshra.s32 %v1158, 3
  %v1194 = vshra.s32 %v1159, 3
  %v1195 = vshra.s32 %v1160, 3
  %v1196 = vshra.s32 %v1161, 3
  %v1197 = vshra.s32 %v1162, 3
  %v1198 = vshra.s32 %v1163, 3
  %v1199 = vshra.s32 %v1164, 3
  %v1200 = vshra.s32 %v1165, 3
  %v1201 = vshra.s32 %v1166, 3
  %v1202 = vshra.s32 %v1167, 3
  %v1203 = vshra.s32 %v1168, 3
  %v1204 = vshra.s32 %v1169, 3
  %v1205 = vshra.s32 %v1170, 3
  %v1206 = vshra.s32 %v1171, 3
  %v1207 = vshra.s32 %v1172, 3
  %v1208 = vshra.s32 %v1173, 3
  %v1209 = vshra.s32 %v1174, 3
  %v1210 = vshra.s32 %v1175, 3
  %v1211 = vshra.s32 %v1176, 3
  %v1212 = vshra.s32 %v1177, 3
  %v1213 = vshra.s32 %v1178, 3
  %v1214 = vshra.s32 %v1179, 3
  %v1215 = vshra.s32 %v1180, 3
  %v1216 = vshra.s32 %v1181, 3
  %v1217 = vshra.s32 %v1182, 3
  %v1218 = vshra.s32 %v1183, 3
  %v1219 = vshra.s32 %v1184, 3
  %v1220 = vshra.s32 %v1186, 3
  %v1221 = vshra.s32 %v1187, 3
  %vm1222 = vcmp.eq.s32.totalorder %v1188, %v1220
  %vm1223 = vcmp.eq.s32.totalorder %v1188, %v1221
  %vm1224 = vcmp.eq.s32.totalorder %v1189, %v1220
  %vm1225 = vcmp.eq.s32.totalorder %v1189, %v1221
  %vm1226 = vcmp.eq.s32.totalorder %v1190, %v1220
  %vm1227 = vcmp.eq.s32.totalorder %v1190, %v1221
  %vm1228 = vcmp.eq.s32.totalorder %v1191, %v1220
  %vm1229 = vcmp.eq.s32.totalorder %v1191, %v1221
  %vm1230 = vcmp.eq.s32.totalorder %v1192, %v1220
  %vm1231 = vcmp.eq.s32.totalorder %v1192, %v1221
  %vm1232 = vcmp.eq.s32.totalorder %v1193, %v1220
  %vm1233 = vcmp.eq.s32.totalorder %v1193, %v1221
  %vm1234 = vcmp.eq.s32.totalorder %v1194, %v1220
  %vm1235 = vcmp.eq.s32.totalorder %v1194, %v1221
  %vm1236 = vcmp.eq.s32.totalorder %v1195, %v1220
  %vm1237 = vcmp.eq.s32.totalorder %v1195, %v1221
  %vm1238 = vcmp.eq.s32.totalorder %v1196, %v1220
  %vm1239 = vcmp.eq.s32.totalorder %v1196, %v1221
  %vm1240 = vcmp.eq.s32.totalorder %v1197, %v1220
  %vm1241 = vcmp.eq.s32.totalorder %v1197, %v1221
  %vm1242 = vcmp.eq.s32.totalorder %v1198, %v1220
  %vm1243 = vcmp.eq.s32.totalorder %v1198, %v1221
  %vm1244 = vcmp.eq.s32.totalorder %v1199, %v1220
  %vm1245 = vcmp.eq.s32.totalorder %v1199, %v1221
  %vm1246 = vcmp.eq.s32.totalorder %v1200, %v1220
  %vm1247 = vcmp.eq.s32.totalorder %v1200, %v1221
  %vm1248 = vcmp.eq.s32.totalorder %v1201, %v1220
  %vm1249 = vcmp.eq.s32.totalorder %v1201, %v1221
  %vm1250 = vcmp.eq.s32.totalorder %v1202, %v1220
  %vm1251 = vcmp.eq.s32.totalorder %v1202, %v1221
  %vm1252 = vcmp.eq.s32.totalorder %v1203, %v1220
  %vm1253 = vcmp.eq.s32.totalorder %v1203, %v1221
  %vm1254 = vcmp.eq.s32.totalorder %v1204, %v1220
  %vm1255 = vcmp.eq.s32.totalorder %v1204, %v1221
  %vm1256 = vcmp.eq.s32.totalorder %v1205, %v1220
  %vm1257 = vcmp.eq.s32.totalorder %v1205, %v1221
  %vm1258 = vcmp.eq.s32.totalorder %v1206, %v1220
  %vm1259 = vcmp.eq.s32.totalorder %v1206, %v1221
  %vm1260 = vcmp.eq.s32.totalorder %v1207, %v1220
  %vm1261 = vcmp.eq.s32.totalorder %v1207, %v1221
  %vm1262 = vcmp.eq.s32.totalorder %v1208, %v1220
  %vm1263 = vcmp.eq.s32.totalorder %v1208, %v1221
  %vm1264 = vcmp.eq.s32.totalorder %v1209, %v1220
  %vm1265 = vcmp.eq.s32.totalorder %v1209, %v1221
  %vm1266 = vcmp.eq.s32.totalorder %v1210, %v1220
  %vm1267 = vcmp.eq.s32.totalorder %v1210, %v1221
  %vm1268 = vcmp.eq.s32.totalorder %v1211, %v1220
  %vm1269 = vcmp.eq.s32.totalorder %v1211, %v1221
  %vm1270 = vcmp.eq.s32.totalorder %v1212, %v1220
  %vm1271 = vcmp.eq.s32.totalorder %v1212, %v1221
  %vm1272 = vcmp.eq.s32.totalorder %v1213, %v1220
  %vm1273 = vcmp.eq.s32.totalorder %v1213, %v1221
  %vm1274 = vcmp.eq.s32.totalorder %v1214, %v1220
  %vm1275 = vcmp.eq.s32.totalorder %v1214, %v1221
  %vm1276 = vcmp.eq.s32.totalorder %v1215, %v1220
  %vm1277 = vcmp.eq.s32.totalorder %v1215, %v1221
  %vm1278 = vcmp.eq.s32.totalorder %v1216, %v1220
  %vm1279 = vcmp.eq.s32.totalorder %v1216, %v1221
  %vm1280 = vcmp.eq.s32.totalorder %v1217, %v1220
  %vm1281 = vcmp.eq.s32.totalorder %v1217, %v1221
  %vm1282 = vcmp.eq.s32.totalorder %v1218, %v1220
  %vm1283 = vcmp.eq.s32.totalorder %v1218, %v1221
  %vm1284 = vcmp.eq.s32.totalorder %v1219, %v1220
  %vm1285 = vcmp.eq.s32.totalorder %v1219, %v1221
  %vm1286 = vcmp.le.s32.totalorder %v1186, %v1153
  %vm1287 = vcmp.le.s32.totalorder %v1187, %v1153
  %vm1288 = vcmp.le.s32.totalorder %v1186, %v1154
  %vm1289 = vcmp.le.s32.totalorder %v1187, %v1154
  %vm1290 = vcmp.le.s32.totalorder %v1186, %v1155
  %vm1291 = vcmp.le.s32.totalorder %v1187, %v1155
  %vm1292 = vcmp.le.s32.totalorder %v1186, %v1156
  %vm1293 = vcmp.le.s32.totalorder %v1187, %v1156
  %vm1294 = vcmp.le.s32.totalorder %v1186, %v1157
  %vm1295 = vcmp.le.s32.totalorder %v1187, %v1157
  %vm1296 = vcmp.le.s32.totalorder %v1186, %v1158
  %vm1297 = vcmp.le.s32.totalorder %v1187, %v1158
  %vm1298 = vcmp.le.s32.totalorder %v1186, %v1159
  %vm1299 = vcmp.le.s32.totalorder %v1187, %v1159
  %vm1300 = vcmp.le.s32.totalorder %v1186, %v1160
  %vm1301 = vcmp.le.s32.totalorder %v1187, %v1160
  %vm1302 = vcmp.le.s32.totalorder %v1186, %v1161
  %vm1303 = vcmp.le.s32.totalorder %v1187, %v1161
  %vm1304 = vcmp.le.s32.totalorder %v1186, %v1162
  %vm1305 = vcmp.le.s32.totalorder %v1187, %v1162
  %vm1306 = vcmp.le.s32.totalorder %v1186, %v1163
  %vm1307 = vcmp.le.s32.totalorder %v1187, %v1163
  %vm1308 = vcmp.le.s32.totalorder %v1186, %v1164
  %vm1309 = vcmp.le.s32.totalorder %v1187, %v1164
  %vm1310 = vcmp.le.s32.totalorder %v1186, %v1165
  %vm1311 = vcmp.le.s32.totalorder %v1187, %v1165
  %vm1312 = vcmp.le.s32.totalorder %v1186, %v1166
  %vm1313 = vcmp.le.s32.totalorder %v1187, %v1166
  %vm1314 = vcmp.le.s32.totalorder %v1186, %v1167
  %vm1315 = vcmp.le.s32.totalorder %v1187, %v1167
  %vm1316 = vcmp.le.s32.totalorder %v1186, %v1168
  %vm1317 = vcmp.le.s32.totalorder %v1187, %v1168
  %vm1318 = vcmp.le.s32.totalorder %v1186, %v1169
  %vm1319 = vcmp.le.s32.totalorder %v1187, %v1169
  %vm1320 = vcmp.le.s32.totalorder %v1186, %v1170
  %vm1321 = vcmp.le.s32.totalorder %v1187, %v1170
  %vm1322 = vcmp.le.s32.totalorder %v1186, %v1171
  %vm1323 = vcmp.le.s32.totalorder %v1187, %v1171
  %vm1324 = vcmp.le.s32.totalorder %v1186, %v1172
  %vm1325 = vcmp.le.s32.totalorder %v1187, %v1172
  %vm1326 = vcmp.le.s32.totalorder %v1186, %v1173
  %vm1327 = vcmp.le.s32.totalorder %v1187, %v1173
  %vm1328 = vcmp.le.s32.totalorder %v1186, %v1174
  %vm1329 = vcmp.le.s32.totalorder %v1187, %v1174
  %vm1330 = vcmp.le.s32.totalorder %v1186, %v1175
  %vm1331 = vcmp.le.s32.totalorder %v1187, %v1175
  %vm1332 = vcmp.le.s32.totalorder %v1186, %v1176
  %vm1333 = vcmp.le.s32.totalorder %v1187, %v1176
  %vm1334 = vcmp.le.s32.totalorder %v1186, %v1177
  %vm1335 = vcmp.le.s32.totalorder %v1187, %v1177
  %vm1336 = vcmp.le.s32.totalorder %v1186, %v1178
  %vm1337 = vcmp.le.s32.totalorder %v1187, %v1178
  %vm1338 = vcmp.le.s32.totalorder %v1186, %v1179
  %vm1339 = vcmp.le.s32.totalorder %v1187, %v1179
  %vm1340 = vcmp.le.s32.totalorder %v1186, %v1180
  %vm1341 = vcmp.le.s32.totalorder %v1187, %v1180
  %vm1342 = vcmp.le.s32.totalorder %v1186, %v1181
  %vm1343 = vcmp.le.s32.totalorder %v1187, %v1181
  %vm1344 = vcmp.le.s32.totalorder %v1186, %v1182
  %vm1345 = vcmp.le.s32.totalorder %v1187, %v1182
  %vm1346 = vcmp.le.s32.totalorder %v1186, %v1183
  %vm1347 = vcmp.le.s32.totalorder %v1187, %v1183
  %vm1348 = vcmp.le.s32.totalorder %v1186, %v1184
  %vm1349 = vcmp.le.s32.totalorder %v1187, %v1184
  %vm1350 = vmand %vm1222, %vm1286
  %vm1351 = vmand %vm1223, %vm1287
  %vm1352 = vmand %vm1224, %vm1288
  %vm1353 = vmand %vm1225, %vm1289
  %vm1354 = vmand %vm1226, %vm1290
  %vm1355 = vmand %vm1227, %vm1291
  %vm1356 = vmand %vm1228, %vm1292
  %vm1357 = vmand %vm1229, %vm1293
  %vm1358 = vmand %vm1230, %vm1294
  %vm1359 = vmand %vm1231, %vm1295
  %vm1360 = vmand %vm1232, %vm1296
  %vm1361 = vmand %vm1233, %vm1297
  %vm1362 = vmand %vm1234, %vm1298
  %vm1363 = vmand %vm1235, %vm1299
  %vm1364 = vmand %vm1236, %vm1300
  %vm1365 = vmand %vm1237, %vm1301
  %vm1366 = vmand %vm1238, %vm1302
  %vm1367 = vmand %vm1239, %vm1303
  %vm1368 = vmand %vm1240, %vm1304
  %vm1369 = vmand %vm1241, %vm1305
  %vm1370 = vmand %vm1242, %vm1306
  %vm1371 = vmand %vm1243, %vm1307
  %vm1372 = vmand %vm1244, %vm1308
  %vm1373 = vmand %vm1245, %vm1309
  %vm1374 = vmand %vm1246, %vm1310
  %vm1375 = vmand %vm1247, %vm1311
  %vm1376 = vmand %vm1248, %vm1312
  %vm1377 = vmand %vm1249, %vm1313
  %vm1378 = vmand %vm1250, %vm1314
  %vm1379 = vmand %vm1251, %vm1315
  %vm1380 = vmand %vm1252, %vm1316
  %vm1381 = vmand %vm1253, %vm1317
  %vm1382 = vmand %vm1254, %vm1318
  %vm1383 = vmand %vm1255, %vm1319
  %vm1384 = vmand %vm1256, %vm1320
  %vm1385 = vmand %vm1257, %vm1321
  %vm1386 = vmand %vm1258, %vm1322
  %vm1387 = vmand %vm1259, %vm1323
  %vm1388 = vmand %vm1260, %vm1324
  %vm1389 = vmand %vm1261, %vm1325
  %vm1390 = vmand %vm1262, %vm1326
  %vm1391 = vmand %vm1263, %vm1327
  %vm1392 = vmand %vm1264, %vm1328
  %vm1393 = vmand %vm1265, %vm1329
  %vm1394 = vmand %vm1266, %vm1330
  %vm1395 = vmand %vm1267, %vm1331
  %vm1396 = vmand %vm1268, %vm1332
  %vm1397 = vmand %vm1269, %vm1333
  %vm1398 = vmand %vm1270, %vm1334
  %vm1399 = vmand %vm1271, %vm1335
  %vm1400 = vmand %vm1272, %vm1336
  %vm1401 = vmand %vm1273, %vm1337
  %vm1402 = vmand %vm1274, %vm1338
  %vm1403 = vmand %vm1275, %vm1339
  %vm1404 = vmand %vm1276, %vm1340
  %vm1405 = vmand %vm1277, %vm1341
  %vm1406 = vmand %vm1278, %vm1342
  %vm1407 = vmand %vm1279, %vm1343
  %vm1408 = vmand %vm1280, %vm1344
  %vm1409 = vmand %vm1281, %vm1345
  %vm1410 = vmand %vm1282, %vm1346
  %vm1411 = vmand %vm1283, %vm1347
  %vm1412 = vmand %vm1284, %vm1348
  %vm1413 = vmand %vm1285, %vm1349
  %v1414 = vsel %vm1350, %v1088, -1e+30
  %v1415 = vsel %vm1351, %v1089, -1e+30
  %v1416 = vsel %vm1352, %v1090, -1e+30
  %v1417 = vsel %vm1353, %v1091, -1e+30
  %v1418 = vsel %vm1354, %v1092, -1e+30
  %v1419 = vsel %vm1355, %v1093, -1e+30
  %v1420 = vsel %vm1356, %v1094, -1e+30
  %v1421 = vsel %vm1357, %v1095, -1e+30
  %v1422 = vsel %vm1358, %v1096, -1e+30
  %v1423 = vsel %vm1359, %v1097, -1e+30
  %v1424 = vsel %vm1360, %v1098, -1e+30
  %v1425 = vsel %vm1361, %v1099, -1e+30
  %v1426 = vsel %vm1362, %v1100, -1e+30
  %v1427 = vsel %vm1363, %v1101, -1e+30
  %v1428 = vsel %vm1364, %v1102, -1e+30
  %v1429 = vsel %vm1365, %v1103, -1e+30
  %v1430 = vsel %vm1366, %v1104, -1e+30
  %v1431 = vsel %vm1367, %v1105, -1e+30
  %v1432 = vsel %vm1368, %v1106, -1e+30
  %v1433 = vsel %vm1369, %v1107, -1e+30
  %v1434 = vsel %vm1370, %v1108, -1e+30
  %v1435 = vsel %vm1371, %v1109, -1e+30
  %v1436 = vsel %vm1372, %v1110, -1e+30
  %v1437 = vsel %vm1373, %v1111, -1e+30
  %v1438 = vsel %vm1374, %v1112, -1e+30
  %v1439 = vsel %vm1375, %v1113, -1e+30
  %v1440 = vsel %vm1376, %v1114, -1e+30
  %v1441 = vsel %vm1377, %v1115, -1e+30
  %v1442 = vsel %vm1378, %v1116, -1e+30
  %v1443 = vsel %vm1379, %v1117, -1e+30
  %v1444 = vsel %vm1380, %v1118, -1e+30
  %v1445 = vsel %vm1381, %v1119, -1e+30
  %v1446 = vsel %vm1382, %v1120, -1e+30
  %v1447 = vsel %vm1383, %v1121, -1e+30
  %v1448 = vsel %vm1384, %v1122, -1e+30
  %v1449 = vsel %vm1385, %v1123, -1e+30
  %v1450 = vsel %vm1386, %v1124, -1e+30
  %v1451 = vsel %vm1387, %v1125, -1e+30
  %v1452 = vsel %vm1388, %v1126, -1e+30
  %v1453 = vsel %vm1389, %v1127, -1e+30
  %v1454 = vsel %vm1390, %v1128, -1e+30
  %v1455 = vsel %vm1391, %v1129, -1e+30
  %v1456 = vsel %vm1392, %v1130, -1e+30
  %v1457 = vsel %vm1393, %v1131, -1e+30
  %v1458 = vsel %vm1394, %v1132, -1e+30
  %v1459 = vsel %vm1395, %v1133, -1e+30
  %v1460 = vsel %vm1396, %v1134, -1e+30
  %v1461 = vsel %vm1397, %v1135, -1e+30
  %v1462 = vsel %vm1398, %v1136, -1e+30
  %v1463 = vsel %vm1399, %v1137, -1e+30
  %v1464 = vsel %vm1400, %v1138, -1e+30
  %v1465 = vsel %vm1401, %v1139, -1e+30
  %v1466 = vsel %vm1402, %v1140, -1e+30
  %v1467 = vsel %vm1403, %v1141, -1e+30
  %v1468 = vsel %vm1404, %v1142, -1e+30
  %v1469 = vsel %vm1405, %v1143, -1e+30
  %v1470 = vsel %vm1406, %v1144, -1e+30
  %v1471 = vsel %vm1407, %v1145, -1e+30
  %v1472 = vsel %vm1408, %v1146, -1e+30
  %v1473 = vsel %vm1409, %v1147, -1e+30
  %v1474 = vsel %vm1410, %v1148, -1e+30
  %v1475 = vsel %vm1411, %v1149, -1e+30
  %v1476 = vsel %vm1412, %v1150, -1e+30
  %v1477 = vsel %vm1413, %v1151, -1e+30
  %v1478 = vmax.f32 %v1414, %v1415
  %1479 = vmax.xlane.f32.xlu0 %v1478
  %v1480 = vpop.xlane.xlu0 %1479
  %v1481 = vmax.f32 %v1416, %v1417
  %1482 = vmax.xlane.f32.xlu0 %v1481
  %v1483 = vpop.xlane.xlu0 %1482
  %v1484 = vmax.f32 %v1418, %v1419
  %1485 = vmax.xlane.f32.xlu0 %v1484
  %v1486 = vpop.xlane.xlu0 %1485
  %v1487 = vmax.f32 %v1420, %v1421
  %1488 = vmax.xlane.f32.xlu0 %v1487
  %v1489 = vpop.xlane.xlu0 %1488
  %v1490 = vmax.f32 %v1422, %v1423
  %1491 = vmax.xlane.f32.xlu0 %v1490
  %v1492 = vpop.xlane.xlu0 %1491
  %v1493 = vmax.f32 %v1424, %v1425
  %1494 = vmax.xlane.f32.xlu0 %v1493
  %v1495 = vpop.xlane.xlu0 %1494
  %v1496 = vmax.f32 %v1426, %v1427
  %1497 = vmax.xlane.f32.xlu0 %v1496
  %v1498 = vpop.xlane.xlu0 %1497
  %v1499 = vmax.f32 %v1428, %v1429
  %1500 = vmax.xlane.f32.xlu0 %v1499
  %v1501 = vpop.xlane.xlu0 %1500
  %v1502 = vmax.f32 %v1430, %v1431
  %1503 = vmax.xlane.f32.xlu0 %v1502
  %v1504 = vpop.xlane.xlu0 %1503
  %v1505 = vmax.f32 %v1432, %v1433
  %1506 = vmax.xlane.f32.xlu0 %v1505
  %v1507 = vpop.xlane.xlu0 %1506
  %v1508 = vmax.f32 %v1434, %v1435
  %1509 = vmax.xlane.f32.xlu0 %v1508
  %v1510 = vpop.xlane.xlu0 %1509
  %v1511 = vmax.f32 %v1436, %v1437
  %1512 = vmax.xlane.f32.xlu0 %v1511
  %v1513 = vpop.xlane.xlu0 %1512
  %v1514 = vmax.f32 %v1438, %v1439
  %1515 = vmax.xlane.f32.xlu0 %v1514
  %v1516 = vpop.xlane.xlu0 %1515
  %v1517 = vmax.f32 %v1440, %v1441
  %1518 = vmax.xlane.f32.xlu0 %v1517
  %v1519 = vpop.xlane.xlu0 %1518
  %v1520 = vmax.f32 %v1442, %v1443
  %1521 = vmax.xlane.f32.xlu0 %v1520
  %v1522 = vpop.xlane.xlu0 %1521
  %v1523 = vmax.f32 %v1444, %v1445
  %1524 = vmax.xlane.f32.xlu0 %v1523
  %v1525 = vpop.xlane.xlu0 %1524
  %v1526 = vmax.f32 %v1446, %v1447
  %1527 = vmax.xlane.f32.xlu0 %v1526
  %v1528 = vpop.xlane.xlu0 %1527
  %v1529 = vmax.f32 %v1448, %v1449
  %1530 = vmax.xlane.f32.xlu0 %v1529
  %v1531 = vpop.xlane.xlu0 %1530
  %v1532 = vmax.f32 %v1450, %v1451
  %1533 = vmax.xlane.f32.xlu0 %v1532
  %v1534 = vpop.xlane.xlu0 %1533
  %v1535 = vmax.f32 %v1452, %v1453
  %1536 = vmax.xlane.f32.xlu0 %v1535
  %v1537 = vpop.xlane.xlu0 %1536
  %v1538 = vmax.f32 %v1454, %v1455
  %1539 = vmax.xlane.f32.xlu0 %v1538
  %v1540 = vpop.xlane.xlu0 %1539
  %v1541 = vmax.f32 %v1456, %v1457
  %1542 = vmax.xlane.f32.xlu0 %v1541
  %v1543 = vpop.xlane.xlu0 %1542
  %v1544 = vmax.f32 %v1458, %v1459
  %1545 = vmax.xlane.f32.xlu0 %v1544
  %v1546 = vpop.xlane.xlu0 %1545
  %v1547 = vmax.f32 %v1460, %v1461
  %1548 = vmax.xlane.f32.xlu0 %v1547
  %v1549 = vpop.xlane.xlu0 %1548
  %v1550 = vmax.f32 %v1462, %v1463
  %1551 = vmax.xlane.f32.xlu0 %v1550
  %v1552 = vpop.xlane.xlu0 %1551
  %v1553 = vmax.f32 %v1464, %v1465
  %1554 = vmax.xlane.f32.xlu0 %v1553
  %v1555 = vpop.xlane.xlu0 %1554
  %v1556 = vmax.f32 %v1466, %v1467
  %1557 = vmax.xlane.f32.xlu0 %v1556
  %v1558 = vpop.xlane.xlu0 %1557
  %v1559 = vmax.f32 %v1468, %v1469
  %1560 = vmax.xlane.f32.xlu0 %v1559
  %v1561 = vpop.xlane.xlu0 %1560
  %v1562 = vmax.f32 %v1470, %v1471
  %1563 = vmax.xlane.f32.xlu0 %v1562
  %v1564 = vpop.xlane.xlu0 %1563
  %v1565 = vmax.f32 %v1472, %v1473
  %1566 = vmax.xlane.f32.xlu0 %v1565
  %v1567 = vpop.xlane.xlu0 %1566
  %v1568 = vmax.f32 %v1474, %v1475
  %1569 = vmax.xlane.f32.xlu0 %v1568
  %v1570 = vpop.xlane.xlu0 %1569
  %v1571 = vmax.f32 %v1476, %v1477
  %1572 = vmax.xlane.f32.xlu0 %v1571
  %v1573 = vpop.xlane.xlu0 %1572
  %v1574 = vsub.f32 %v1414, %v1480
  %v1575 = vsub.f32 %v1415, %v1480
  %v1576 = vsub.f32 %v1416, %v1483
  %v1577 = vsub.f32 %v1417, %v1483
  %v1578 = vsub.f32 %v1418, %v1486
  %v1579 = vsub.f32 %v1419, %v1486
  %v1580 = vsub.f32 %v1420, %v1489
  %v1581 = vsub.f32 %v1421, %v1489
  %v1582 = vsub.f32 %v1422, %v1492
  %v1583 = vsub.f32 %v1423, %v1492
  %v1584 = vsub.f32 %v1424, %v1495
  %v1585 = vsub.f32 %v1425, %v1495
  %v1586 = vsub.f32 %v1426, %v1498
  %v1587 = vsub.f32 %v1427, %v1498
  %v1588 = vsub.f32 %v1428, %v1501
  %v1589 = vsub.f32 %v1429, %v1501
  %v1590 = vsub.f32 %v1430, %v1504
  %v1591 = vsub.f32 %v1431, %v1504
  %v1592 = vsub.f32 %v1432, %v1507
  %v1593 = vsub.f32 %v1433, %v1507
  %v1594 = vsub.f32 %v1434, %v1510
  %v1595 = vsub.f32 %v1435, %v1510
  %v1596 = vsub.f32 %v1436, %v1513
  %v1597 = vsub.f32 %v1437, %v1513
  %v1598 = vsub.f32 %v1438, %v1516
  %v1599 = vsub.f32 %v1439, %v1516
  %v1600 = vsub.f32 %v1440, %v1519
  %v1601 = vsub.f32 %v1441, %v1519
  %v1602 = vsub.f32 %v1442, %v1522
  %v1603 = vsub.f32 %v1443, %v1522
  %v1604 = vsub.f32 %v1444, %v1525
  %v1605 = vsub.f32 %v1445, %v1525
  %v1606 = vsub.f32 %v1446, %v1528
  %v1607 = vsub.f32 %v1447, %v1528
  %v1608 = vsub.f32 %v1448, %v1531
  %v1609 = vsub.f32 %v1449, %v1531
  %v1610 = vsub.f32 %v1450, %v1534
  %v1611 = vsub.f32 %v1451, %v1534
  %v1612 = vsub.f32 %v1452, %v1537
  %v1613 = vsub.f32 %v1453, %v1537
  %v1614 = vsub.f32 %v1454, %v1540
  %v1615 = vsub.f32 %v1455, %v1540
  %v1616 = vsub.f32 %v1456, %v1543
  %v1617 = vsub.f32 %v1457, %v1543
  %v1618 = vsub.f32 %v1458, %v1546
  %v1619 = vsub.f32 %v1459, %v1546
  %v1620 = vsub.f32 %v1460, %v1549
  %v1621 = vsub.f32 %v1461, %v1549
  %v1622 = vsub.f32 %v1462, %v1552
  %v1623 = vsub.f32 %v1463, %v1552
  %v1624 = vsub.f32 %v1464, %v1555
  %v1625 = vsub.f32 %v1465, %v1555
  %v1626 = vsub.f32 %v1466, %v1558
  %v1627 = vsub.f32 %v1467, %v1558
  %v1628 = vsub.f32 %v1468, %v1561
  %v1629 = vsub.f32 %v1469, %v1561
  %v1630 = vsub.f32 %v1470, %v1564
  %v1631 = vsub.f32 %v1471, %v1564
  %v1632 = vsub.f32 %v1472, %v1567
  %v1633 = vsub.f32 %v1473, %v1567
  %v1634 = vsub.f32 %v1474, %v1570
  %v1635 = vsub.f32 %v1475, %v1570
  %v1636 = vsub.f32 %v1476, %v1573
  %v1637 = vsub.f32 %v1477, %v1573
  %v1638 = vmul.f32 %v1574, 1.442695
  %v1639 = vpow.pop %v1638
  %v1640 = vmul.f32 %v1575, 1.442695
  %v1641 = vpow.pop %v1640
  %v1642 = vmul.f32 %v1576, 1.442695
  %v1643 = vpow.pop %v1642
  %v1644 = vmul.f32 %v1577, 1.442695
  %v1645 = vpow.pop %v1644
  %v1646 = vmul.f32 %v1578, 1.442695
  %v1647 = vpow.pop %v1646
  %v1648 = vmul.f32 %v1579, 1.442695
  %v1649 = vpow.pop %v1648
  %v1650 = vmul.f32 %v1580, 1.442695
  %v1651 = vpow.pop %v1650
  %v1652 = vmul.f32 %v1581, 1.442695
  %v1653 = vpow.pop %v1652
  %v1654 = vmul.f32 %v1582, 1.442695
  %v1655 = vpow.pop %v1654
  %v1656 = vmul.f32 %v1583, 1.442695
  %v1657 = vpow.pop %v1656
  %v1658 = vmul.f32 %v1584, 1.442695
  %v1659 = vpow.pop %v1658
  %v1660 = vmul.f32 %v1585, 1.442695
  %v1661 = vpow.pop %v1660
  %v1662 = vmul.f32 %v1586, 1.442695
  %v1663 = vpow.pop %v1662
  %v1664 = vmul.f32 %v1587, 1.442695
  %v1665 = vpow.pop %v1664
  %v1666 = vmul.f32 %v1588, 1.442695
  %v1667 = vpow.pop %v1666
  %v1668 = vmul.f32 %v1589, 1.442695
  %v1669 = vpow.pop %v1668
  %v1670 = vmul.f32 %v1590, 1.442695
  %v1671 = vpow.pop %v1670
  %v1672 = vmul.f32 %v1591, 1.442695
  %v1673 = vpow.pop %v1672
  %v1674 = vmul.f32 %v1592, 1.442695
  %v1675 = vpow.pop %v1674
  %v1676 = vmul.f32 %v1593, 1.442695
  %v1677 = vpow.pop %v1676
  %v1678 = vmul.f32 %v1594, 1.442695
  %v1679 = vpow.pop %v1678
  %v1680 = vmul.f32 %v1595, 1.442695
  %v1681 = vpow.pop %v1680
  %v1682 = vmul.f32 %v1596, 1.442695
  %v1683 = vpow.pop %v1682
  %v1684 = vmul.f32 %v1597, 1.442695
  %v1685 = vpow.pop %v1684
  %v1686 = vmul.f32 %v1598, 1.442695
  %v1687 = vpow.pop %v1686
  %v1688 = vmul.f32 %v1599, 1.442695
  %v1689 = vpow.pop %v1688
  %v1690 = vmul.f32 %v1600, 1.442695
  %v1691 = vpow.pop %v1690
  %v1692 = vmul.f32 %v1601, 1.442695
  %v1693 = vpow.pop %v1692
  %v1694 = vmul.f32 %v1602, 1.442695
  %v1695 = vpow.pop %v1694
  %v1696 = vmul.f32 %v1603, 1.442695
  %v1697 = vpow.pop %v1696
  %v1698 = vmul.f32 %v1604, 1.442695
  %v1699 = vpow.pop %v1698
  %v1700 = vmul.f32 %v1605, 1.442695
  %v1701 = vpow.pop %v1700
  %v1702 = vmul.f32 %v1606, 1.442695
  %v1703 = vpow.pop %v1702
  %v1704 = vmul.f32 %v1607, 1.442695
  %v1705 = vpow.pop %v1704
  %v1706 = vmul.f32 %v1608, 1.442695
  %v1707 = vpow.pop %v1706
  %v1708 = vmul.f32 %v1609, 1.442695
  %v1709 = vpow.pop %v1708
  %v1710 = vmul.f32 %v1610, 1.442695
  %v1711 = vpow.pop %v1710
  %v1712 = vmul.f32 %v1611, 1.442695
  %v1713 = vpow.pop %v1712
  %v1714 = vmul.f32 %v1612, 1.442695
  %v1715 = vpow.pop %v1714
  %v1716 = vmul.f32 %v1613, 1.442695
  %v1717 = vpow.pop %v1716
  %v1718 = vmul.f32 %v1614, 1.442695
  %v1719 = vpow.pop %v1718
  %v1720 = vmul.f32 %v1615, 1.442695
  %v1721 = vpow.pop %v1720
  %v1722 = vmul.f32 %v1616, 1.442695
  %v1723 = vpow.pop %v1722
  %v1724 = vmul.f32 %v1617, 1.442695
  %v1725 = vpow.pop %v1724
  %v1726 = vmul.f32 %v1618, 1.442695
  %v1727 = vpow.pop %v1726
  %v1728 = vmul.f32 %v1619, 1.442695
  %v1729 = vpow.pop %v1728
  %v1730 = vmul.f32 %v1620, 1.442695
  %v1731 = vpow.pop %v1730
  %v1732 = vmul.f32 %v1621, 1.442695
  %v1733 = vpow.pop %v1732
  %v1734 = vmul.f32 %v1622, 1.442695
  %v1735 = vpow.pop %v1734
  %v1736 = vmul.f32 %v1623, 1.442695
  %v1737 = vpow.pop %v1736
  %v1738 = vmul.f32 %v1624, 1.442695
  %v1739 = vpow.pop %v1738
  %v1740 = vmul.f32 %v1625, 1.442695
  %v1741 = vpow.pop %v1740
  %v1742 = vmul.f32 %v1626, 1.442695
  %v1743 = vpow.pop %v1742
  %v1744 = vmul.f32 %v1627, 1.442695
  %v1745 = vpow.pop %v1744
  %v1746 = vmul.f32 %v1628, 1.442695
  %v1747 = vpow.pop %v1746
  %v1748 = vmul.f32 %v1629, 1.442695
  %v1749 = vpow.pop %v1748
  %v1750 = vmul.f32 %v1630, 1.442695
  %v1751 = vpow.pop %v1750
  %v1752 = vmul.f32 %v1631, 1.442695
  %v1753 = vpow.pop %v1752
  %v1754 = vmul.f32 %v1632, 1.442695
  %v1755 = vpow.pop %v1754
  %v1756 = vmul.f32 %v1633, 1.442695
  %v1757 = vpow.pop %v1756
  %v1758 = vmul.f32 %v1634, 1.442695
  %v1759 = vpow.pop %v1758
  %v1760 = vmul.f32 %v1635, 1.442695
  %v1761 = vpow.pop %v1760
  %v1762 = vmul.f32 %v1636, 1.442695
  %v1763 = vpow.pop %v1762
  %v1764 = vmul.f32 %v1637, 1.442695
  %v1765 = vpow.pop %v1764
  %v1766 = vadd.f32 %v1639, %v1641
  %1767 = vadd.xlane.f32.xlu0 %v1766
  %v1768 = vpop.xlane.xlu0 %1767
  %v1769 = vadd.f32 %v1643, %v1645
  %1770 = vadd.xlane.f32.xlu0 %v1769
  %v1771 = vpop.xlane.xlu0 %1770
  %v1772 = vadd.f32 %v1647, %v1649
  %1773 = vadd.xlane.f32.xlu0 %v1772
  %v1774 = vpop.xlane.xlu0 %1773
  %v1775 = vadd.f32 %v1651, %v1653
  %1776 = vadd.xlane.f32.xlu0 %v1775
  %v1777 = vpop.xlane.xlu0 %1776
  %v1778 = vadd.f32 %v1655, %v1657
  %1779 = vadd.xlane.f32.xlu0 %v1778
  %v1780 = vpop.xlane.xlu0 %1779
  %v1781 = vadd.f32 %v1659, %v1661
  %1782 = vadd.xlane.f32.xlu0 %v1781
  %v1783 = vpop.xlane.xlu0 %1782
  %v1784 = vadd.f32 %v1663, %v1665
  %1785 = vadd.xlane.f32.xlu0 %v1784
  %v1786 = vpop.xlane.xlu0 %1785
  %v1787 = vadd.f32 %v1667, %v1669
  %1788 = vadd.xlane.f32.xlu0 %v1787
  %v1789 = vpop.xlane.xlu0 %1788
  %v1790 = vadd.f32 %v1671, %v1673
  %1791 = vadd.xlane.f32.xlu0 %v1790
  %v1792 = vpop.xlane.xlu0 %1791
  %v1793 = vadd.f32 %v1675, %v1677
  %1794 = vadd.xlane.f32.xlu0 %v1793
  %v1795 = vpop.xlane.xlu0 %1794
  %v1796 = vadd.f32 %v1679, %v1681
  %1797 = vadd.xlane.f32.xlu0 %v1796
  %v1798 = vpop.xlane.xlu0 %1797
  %v1799 = vadd.f32 %v1683, %v1685
  %1800 = vadd.xlane.f32.xlu0 %v1799
  %v1801 = vpop.xlane.xlu0 %1800
  %v1802 = vadd.f32 %v1687, %v1689
  %1803 = vadd.xlane.f32.xlu0 %v1802
  %v1804 = vpop.xlane.xlu0 %1803
  %v1805 = vadd.f32 %v1691, %v1693
  %1806 = vadd.xlane.f32.xlu0 %v1805
  %v1807 = vpop.xlane.xlu0 %1806
  %v1808 = vadd.f32 %v1695, %v1697
  %1809 = vadd.xlane.f32.xlu0 %v1808
  %v1810 = vpop.xlane.xlu0 %1809
  %v1811 = vadd.f32 %v1699, %v1701
  %1812 = vadd.xlane.f32.xlu0 %v1811
  %v1813 = vpop.xlane.xlu0 %1812
  %v1814 = vadd.f32 %v1703, %v1705
  %1815 = vadd.xlane.f32.xlu0 %v1814
  %v1816 = vpop.xlane.xlu0 %1815
  %v1817 = vadd.f32 %v1707, %v1709
  %1818 = vadd.xlane.f32.xlu0 %v1817
  %v1819 = vpop.xlane.xlu0 %1818
  %v1820 = vadd.f32 %v1711, %v1713
  %1821 = vadd.xlane.f32.xlu0 %v1820
  %v1822 = vpop.xlane.xlu0 %1821
  %v1823 = vadd.f32 %v1715, %v1717
  %1824 = vadd.xlane.f32.xlu0 %v1823
  %v1825 = vpop.xlane.xlu0 %1824
  %v1826 = vadd.f32 %v1719, %v1721
  %1827 = vadd.xlane.f32.xlu0 %v1826
  %v1828 = vpop.xlane.xlu0 %1827
  %v1829 = vadd.f32 %v1723, %v1725
  %1830 = vadd.xlane.f32.xlu0 %v1829
  %v1831 = vpop.xlane.xlu0 %1830
  %v1832 = vadd.f32 %v1727, %v1729
  %1833 = vadd.xlane.f32.xlu0 %v1832
  %v1834 = vpop.xlane.xlu0 %1833
  %v1835 = vadd.f32 %v1731, %v1733
  %1836 = vadd.xlane.f32.xlu0 %v1835
  %v1837 = vpop.xlane.xlu0 %1836
  %v1838 = vadd.f32 %v1735, %v1737
  %1839 = vadd.xlane.f32.xlu0 %v1838
  %v1840 = vpop.xlane.xlu0 %1839
  %v1841 = vadd.f32 %v1739, %v1741
  %1842 = vadd.xlane.f32.xlu0 %v1841
  %v1843 = vpop.xlane.xlu0 %1842
  %v1844 = vadd.f32 %v1743, %v1745
  %1845 = vadd.xlane.f32.xlu0 %v1844
  %v1846 = vpop.xlane.xlu0 %1845
  %v1847 = vadd.f32 %v1747, %v1749
  %1848 = vadd.xlane.f32.xlu0 %v1847
  %v1849 = vpop.xlane.xlu0 %1848
  %v1850 = vadd.f32 %v1751, %v1753
  %1851 = vadd.xlane.f32.xlu0 %v1850
  %v1852 = vpop.xlane.xlu0 %1851
  %v1853 = vadd.f32 %v1755, %v1757
  %1854 = vadd.xlane.f32.xlu0 %v1853
  %v1855 = vpop.xlane.xlu0 %1854
  %v1856 = vadd.f32 %v1759, %v1761
  %1857 = vadd.xlane.f32.xlu0 %v1856
  %v1858 = vpop.xlane.xlu0 %1857
  %v1859 = vadd.f32 %v1763, %v1765
  %1860 = vadd.xlane.f32.xlu0 %v1859
  %v1861 = vpop.xlane.xlu0 %1860
  %v1862 = vrcp.pop %v1768
  %v1863 = vrcp.pop %v1771
  %v1864 = vrcp.pop %v1774
  %v1865 = vrcp.pop %v1777
  %v1866 = vrcp.pop %v1780
  %v1867 = vrcp.pop %v1783
  %v1868 = vrcp.pop %v1786
  %v1869 = vrcp.pop %v1789
  %v1870 = vrcp.pop %v1792
  %v1871 = vrcp.pop %v1795
  %v1872 = vrcp.pop %v1798
  %v1873 = vrcp.pop %v1801
  %v1874 = vrcp.pop %v1804
  %v1875 = vrcp.pop %v1807
  %v1876 = vrcp.pop %v1810
  %v1877 = vrcp.pop %v1813
  %v1878 = vrcp.pop %v1816
  %v1879 = vrcp.pop %v1819
  %v1880 = vrcp.pop %v1822
  %v1881 = vrcp.pop %v1825
  %v1882 = vrcp.pop %v1828
  %v1883 = vrcp.pop %v1831
  %v1884 = vrcp.pop %v1834
  %v1885 = vrcp.pop %v1837
  %v1886 = vrcp.pop %v1840
  %v1887 = vrcp.pop %v1843
  %v1888 = vrcp.pop %v1846
  %v1889 = vrcp.pop %v1849
  %v1890 = vrcp.pop %v1852
  %v1891 = vrcp.pop %v1855
  %v1892 = vrcp.pop %v1858
  %v1893 = vrcp.pop %v1861
  %v1894 = vmul.f32 %v1639, %v1862
  %v1895 = vmul.f32 %v1641, %v1862
  %v1896 = vmul.f32 %v1643, %v1863
  %v1897 = vmul.f32 %v1645, %v1863
  %v1898 = vmul.f32 %v1647, %v1864
  %v1899 = vmul.f32 %v1649, %v1864
  %v1900 = vmul.f32 %v1651, %v1865
  %v1901 = vmul.f32 %v1653, %v1865
  %v1902 = vmul.f32 %v1655, %v1866
  %v1903 = vmul.f32 %v1657, %v1866
  %v1904 = vmul.f32 %v1659, %v1867
  %v1905 = vmul.f32 %v1661, %v1867
  %v1906 = vmul.f32 %v1663, %v1868
  %v1907 = vmul.f32 %v1665, %v1868
  %v1908 = vmul.f32 %v1667, %v1869
  %v1909 = vmul.f32 %v1669, %v1869
  %v1910 = vmul.f32 %v1671, %v1870
  %v1911 = vmul.f32 %v1673, %v1870
  %v1912 = vmul.f32 %v1675, %v1871
  %v1913 = vmul.f32 %v1677, %v1871
  %v1914 = vmul.f32 %v1679, %v1872
  %v1915 = vmul.f32 %v1681, %v1872
  %v1916 = vmul.f32 %v1683, %v1873
  %v1917 = vmul.f32 %v1685, %v1873
  %v1918 = vmul.f32 %v1687, %v1874
  %v1919 = vmul.f32 %v1689, %v1874
  %v1920 = vmul.f32 %v1691, %v1875
  %v1921 = vmul.f32 %v1693, %v1875
  %v1922 = vmul.f32 %v1695, %v1876
  %v1923 = vmul.f32 %v1697, %v1876
  %v1924 = vmul.f32 %v1699, %v1877
  %v1925 = vmul.f32 %v1701, %v1877
  %v1926 = vmul.f32 %v1703, %v1878
  %v1927 = vmul.f32 %v1705, %v1878
  %v1928 = vmul.f32 %v1707, %v1879
  %v1929 = vmul.f32 %v1709, %v1879
  %v1930 = vmul.f32 %v1711, %v1880
  %v1931 = vmul.f32 %v1713, %v1880
  %v1932 = vmul.f32 %v1715, %v1881
  %v1933 = vmul.f32 %v1717, %v1881
  %v1934 = vmul.f32 %v1719, %v1882
  %v1935 = vmul.f32 %v1721, %v1882
  %v1936 = vmul.f32 %v1723, %v1883
  %v1937 = vmul.f32 %v1725, %v1883
  %v1938 = vmul.f32 %v1727, %v1884
  %v1939 = vmul.f32 %v1729, %v1884
  %v1940 = vmul.f32 %v1731, %v1885
  %v1941 = vmul.f32 %v1733, %v1885
  %v1942 = vmul.f32 %v1735, %v1886
  %v1943 = vmul.f32 %v1737, %v1886
  %v1944 = vmul.f32 %v1739, %v1887
  %v1945 = vmul.f32 %v1741, %v1887
  %v1946 = vmul.f32 %v1743, %v1888
  %v1947 = vmul.f32 %v1745, %v1888
  %v1948 = vmul.f32 %v1747, %v1889
  %v1949 = vmul.f32 %v1749, %v1889
  %v1950 = vmul.f32 %v1751, %v1890
  %v1951 = vmul.f32 %v1753, %v1890
  %v1952 = vmul.f32 %v1755, %v1891
  %v1953 = vmul.f32 %v1757, %v1891
  %v1954 = vmul.f32 %v1759, %v1892
  %v1955 = vmul.f32 %v1761, %v1892
  %v1956 = vmul.f32 %v1763, %v1893
  %v1957 = vmul.f32 %v1765, %v1893
  %v1958 = vpack.c.bf16 %v1896, %v1894
  %v1959 = vpack.c.bf16 %v1897, %v1895
  %v1960 = vpack.c.bf16 %v1900, %v1898
  %v1961 = vpack.c.bf16 %v1901, %v1899
  %v1962 = vpack.c.bf16 %v1904, %v1902
  %v1963 = vpack.c.bf16 %v1905, %v1903
  %v1964 = vpack.c.bf16 %v1908, %v1906
  %v1965 = vpack.c.bf16 %v1909, %v1907
  %v1966 = vpack.c.bf16 %v1912, %v1910
  %v1967 = vpack.c.bf16 %v1913, %v1911
  %v1968 = vpack.c.bf16 %v1916, %v1914
  %v1969 = vpack.c.bf16 %v1917, %v1915
  %v1970 = vpack.c.bf16 %v1920, %v1918
  %v1971 = vpack.c.bf16 %v1921, %v1919
  %v1972 = vpack.c.bf16 %v1924, %v1922
  %v1973 = vpack.c.bf16 %v1925, %v1923
  %v1974 = vpack.c.bf16 %v1928, %v1926
  %v1975 = vpack.c.bf16 %v1929, %v1927
  %v1976 = vpack.c.bf16 %v1932, %v1930
  %v1977 = vpack.c.bf16 %v1933, %v1931
  %v1978 = vpack.c.bf16 %v1936, %v1934
  %v1979 = vpack.c.bf16 %v1937, %v1935
  %v1980 = vpack.c.bf16 %v1940, %v1938
  %v1981 = vpack.c.bf16 %v1941, %v1939
  %v1982 = vpack.c.bf16 %v1944, %v1942
  %v1983 = vpack.c.bf16 %v1945, %v1943
  %v1984 = vpack.c.bf16 %v1948, %v1946
  %v1985 = vpack.c.bf16 %v1949, %v1947
  %v1986 = vpack.c.bf16 %v1952, %v1950
  %v1987 = vpack.c.bf16 %v1953, %v1951
  %v1988 = vpack.c.bf16 %v1956, %v1954
  %v1989 = vpack.c.bf16 %v1957, %v1955
  %1990 = vrot.lane.b32.xlu0 %v750, 96
  %v1991 = vpop.permute.xlu0 %1990
  %1992 = vrot.lane.b32.xlu0 %v751, 96
  %v1993 = vpop.permute.xlu0 %1992
  %1994 = vrot.lane.b32.xlu0 %v752, 96
  %v1995 = vpop.permute.xlu0 %1994
  %1996 = vrot.lane.b32.xlu0 %v753, 96
  %v1997 = vpop.permute.xlu0 %1996
  %1998 = vrot.lane.b32.xlu0 %v754, 96
  %v1999 = vpop.permute.xlu0 %1998
  %2000 = vrot.lane.b32.xlu0 %v755, 96
  %v2001 = vpop.permute.xlu0 %2000
  %2002 = vrot.lane.b32.xlu0 %v756, 96
  %v2003 = vpop.permute.xlu0 %2002
  %2004 = vrot.lane.b32.xlu0 %v757, 96
  %v2005 = vpop.permute.xlu0 %2004
  %2006 = vrot.lane.b32.xlu0 %v758, 96
  %v2007 = vpop.permute.xlu0 %2006
  %2008 = vrot.lane.b32.xlu0 %v759, 96
  %v2009 = vpop.permute.xlu0 %2008
  %2010 = vrot.lane.b32.xlu0 %v760, 96
  %v2011 = vpop.permute.xlu0 %2010
  %2012 = vrot.lane.b32.xlu0 %v761, 96
  %v2013 = vpop.permute.xlu0 %2012
  %2014 = vrot.lane.b32.xlu0 %v762, 96
  %v2015 = vpop.permute.xlu0 %2014
  %2016 = vrot.lane.b32.xlu0 %v763, 96
  %v2017 = vpop.permute.xlu0 %2016
  %2018 = vrot.lane.b32.xlu0 %v764, 96
  %v2019 = vpop.permute.xlu0 %2018
  %2020 = vrot.lane.b32.xlu0 %v765, 96
  %v2021 = vpop.permute.xlu0 %2020
  %2038 = vmatpush.bf16.msra.mxu0 %v2005
  %2039 = vmatpush.bf16.msra.mxu0 %v2003
  %2040 = vmatpush.bf16.msra.mxu0 %v2001
  %2041 = vmatpush.bf16.msra.mxu0 %v1999
  %2042 = vmatpush.bf16.msra.mxu0 %v1997
  %2043 = vmatpush.bf16.msra.mxu0 %v1995
  %2044 = vmatpush.bf16.msra.mxu0 %v1993
  %2045 = vmatpush.bf16.msra.mxu0 %v1991
  %2046 = vmatmul.bf16.gmra.mxu0 %v1958
  %v2047 = vpop.f32.mrf.mxu0
  %v2048 = vadd.f32 0.0, %v2047
  %v2049 = vpop.f32.mrf.mxu0
  %v2050 = vadd.f32 0.0, %v2049
  %2051 = vmatmul.bf16.gmra.mxu0 %v1960
  %v2052 = vpop.f32.mrf.mxu0
  %v2053 = vadd.f32 0.0, %v2052
  %v2054 = vpop.f32.mrf.mxu0
  %v2055 = vadd.f32 0.0, %v2054
  %2056 = vmatmul.bf16.gmra.mxu0 %v1962
  %v2057 = vpop.f32.mrf.mxu0
  %v2058 = vadd.f32 0.0, %v2057
  %v2059 = vpop.f32.mrf.mxu0
  %v2060 = vadd.f32 0.0, %v2059
  %2061 = vmatmul.bf16.gmra.mxu0 %v1964
  %v2062 = vpop.f32.mrf.mxu0
  %v2063 = vadd.f32 0.0, %v2062
  %v2064 = vpop.f32.mrf.mxu0
  %v2065 = vadd.f32 0.0, %v2064
  %2066 = vmatmul.bf16.gmra.mxu0 %v1966
  %v2067 = vpop.f32.mrf.mxu0
  %v2068 = vadd.f32 0.0, %v2067
  %v2069 = vpop.f32.mrf.mxu0
  %v2070 = vadd.f32 0.0, %v2069
  %2071 = vmatmul.bf16.gmra.mxu0 %v1968
  %v2072 = vpop.f32.mrf.mxu0
  %v2073 = vadd.f32 0.0, %v2072
  %v2074 = vpop.f32.mrf.mxu0
  %v2075 = vadd.f32 0.0, %v2074
  %2076 = vmatmul.bf16.gmra.mxu0 %v1970
  %v2077 = vpop.f32.mrf.mxu0
  %v2078 = vadd.f32 0.0, %v2077
  %v2079 = vpop.f32.mrf.mxu0
  %v2080 = vadd.f32 0.0, %v2079
  %2081 = vmatmul.bf16.gmra.mxu0 %v1972
  %v2082 = vpop.f32.mrf.mxu0
  %v2083 = vadd.f32 0.0, %v2082
  %v2084 = vpop.f32.mrf.mxu0
  %v2085 = vadd.f32 0.0, %v2084
  %2086 = vmatmul.bf16.gmra.mxu0 %v1974
  %v2087 = vpop.f32.mrf.mxu0
  %v2088 = vadd.f32 0.0, %v2087
  %v2089 = vpop.f32.mrf.mxu0
  %v2090 = vadd.f32 0.0, %v2089
  %2091 = vmatmul.bf16.gmra.mxu0 %v1976
  %v2092 = vpop.f32.mrf.mxu0
  %v2093 = vadd.f32 0.0, %v2092
  %v2094 = vpop.f32.mrf.mxu0
  %v2095 = vadd.f32 0.0, %v2094
  %2096 = vmatmul.bf16.gmra.mxu0 %v1978
  %v2097 = vpop.f32.mrf.mxu0
  %v2098 = vadd.f32 0.0, %v2097
  %v2099 = vpop.f32.mrf.mxu0
  %v2100 = vadd.f32 0.0, %v2099
  %2101 = vmatmul.bf16.gmra.mxu0 %v1980
  %v2102 = vpop.f32.mrf.mxu0
  %v2103 = vadd.f32 0.0, %v2102
  %v2104 = vpop.f32.mrf.mxu0
  %v2105 = vadd.f32 0.0, %v2104
  %2106 = vmatmul.bf16.gmra.mxu0 %v1982
  %v2107 = vpop.f32.mrf.mxu0
  %v2108 = vadd.f32 0.0, %v2107
  %v2109 = vpop.f32.mrf.mxu0
  %v2110 = vadd.f32 0.0, %v2109
  %2111 = vmatmul.bf16.gmra.mxu0 %v1984
  %v2112 = vpop.f32.mrf.mxu0
  %v2113 = vadd.f32 0.0, %v2112
  %v2114 = vpop.f32.mrf.mxu0
  %v2115 = vadd.f32 0.0, %v2114
  %2116 = vmatmul.bf16.gmra.mxu0 %v1986
  %v2117 = vpop.f32.mrf.mxu0
  %v2118 = vadd.f32 0.0, %v2117
  %v2119 = vpop.f32.mrf.mxu0
  %v2120 = vadd.f32 0.0, %v2119
  %2121 = vmatmul.bf16.gmra.mxu0 %v1988
  %v2122 = vpop.f32.mrf.mxu0
  %v2123 = vadd.f32 0.0, %v2122
  %v2124 = vpop.f32.mrf.mxu0
  %v2125 = vadd.f32 0.0, %v2124
  %2126 = vdwg.mxu0
  %2127 = vmatpush.bf16.msra.mxu0 %v2021
  %2128 = vmatpush.bf16.msra.mxu0 %v2019
  %2129 = vmatpush.bf16.msra.mxu0 %v2017
  %2130 = vmatpush.bf16.msra.mxu0 %v2015
  %2131 = vmatpush.bf16.msra.mxu0 %v2013
  %2132 = vmatpush.bf16.msra.mxu0 %v2011
  %2133 = vmatpush.bf16.msra.mxu0 %v2009
  %2134 = vmatpush.bf16.msra.mxu0 %v2007
  %2135 = vmatmul.bf16.gmra.mxu0 %v1959
  %v2136 = vpop.f32.mrf.mxu0
  %v2137 = vadd.f32 %v2048, %v2136
  %v2138 = vpop.f32.mrf.mxu0
  %v2139 = vadd.f32 %v2050, %v2138
  %2140 = vmatmul.bf16.gmra.mxu0 %v1961
  %v2141 = vpop.f32.mrf.mxu0
  %v2142 = vadd.f32 %v2053, %v2141
  %v2143 = vpop.f32.mrf.mxu0
  %v2144 = vadd.f32 %v2055, %v2143
  %2145 = vmatmul.bf16.gmra.mxu0 %v1963
  %v2146 = vpop.f32.mrf.mxu0
  %v2147 = vadd.f32 %v2058, %v2146
  %v2148 = vpop.f32.mrf.mxu0
  %v2149 = vadd.f32 %v2060, %v2148
  %2150 = vmatmul.bf16.gmra.mxu0 %v1965
  %v2151 = vpop.f32.mrf.mxu0
  %v2152 = vadd.f32 %v2063, %v2151
  %v2153 = vpop.f32.mrf.mxu0
  %v2154 = vadd.f32 %v2065, %v2153
  %2155 = vmatmul.bf16.gmra.mxu0 %v1967
  %v2156 = vpop.f32.mrf.mxu0
  %v2157 = vadd.f32 %v2068, %v2156
  %v2158 = vpop.f32.mrf.mxu0
  %v2159 = vadd.f32 %v2070, %v2158
  %2160 = vmatmul.bf16.gmra.mxu0 %v1969
  %v2161 = vpop.f32.mrf.mxu0
  %v2162 = vadd.f32 %v2073, %v2161
  %v2163 = vpop.f32.mrf.mxu0
  %v2164 = vadd.f32 %v2075, %v2163
  %2165 = vmatmul.bf16.gmra.mxu0 %v1971
  %v2166 = vpop.f32.mrf.mxu0
  %v2167 = vadd.f32 %v2078, %v2166
  %v2168 = vpop.f32.mrf.mxu0
  %v2169 = vadd.f32 %v2080, %v2168
  %2170 = vmatmul.bf16.gmra.mxu0 %v1973
  %v2171 = vpop.f32.mrf.mxu0
  %v2172 = vadd.f32 %v2083, %v2171
  %v2173 = vpop.f32.mrf.mxu0
  %v2174 = vadd.f32 %v2085, %v2173
  %2175 = vmatmul.bf16.gmra.mxu0 %v1975
  %v2176 = vpop.f32.mrf.mxu0
  %v2177 = vadd.f32 %v2088, %v2176
  %v2178 = vpop.f32.mrf.mxu0
  %v2179 = vadd.f32 %v2090, %v2178
  %2180 = vmatmul.bf16.gmra.mxu0 %v1977
  %v2181 = vpop.f32.mrf.mxu0
  %v2182 = vadd.f32 %v2093, %v2181
  %v2183 = vpop.f32.mrf.mxu0
  %v2184 = vadd.f32 %v2095, %v2183
  %2185 = vmatmul.bf16.gmra.mxu0 %v1979
  %v2186 = vpop.f32.mrf.mxu0
  %v2187 = vadd.f32 %v2098, %v2186
  %v2188 = vpop.f32.mrf.mxu0
  %v2189 = vadd.f32 %v2100, %v2188
  %2190 = vmatmul.bf16.gmra.mxu0 %v1981
  %v2191 = vpop.f32.mrf.mxu0
  %v2192 = vadd.f32 %v2103, %v2191
  %v2193 = vpop.f32.mrf.mxu0
  %v2194 = vadd.f32 %v2105, %v2193
  %2195 = vmatmul.bf16.gmra.mxu0 %v1983
  %v2196 = vpop.f32.mrf.mxu0
  %v2197 = vadd.f32 %v2108, %v2196
  %v2198 = vpop.f32.mrf.mxu0
  %v2199 = vadd.f32 %v2110, %v2198
  %2200 = vmatmul.bf16.gmra.mxu0 %v1985
  %v2201 = vpop.f32.mrf.mxu0
  %v2202 = vadd.f32 %v2113, %v2201
  %v2203 = vpop.f32.mrf.mxu0
  %v2204 = vadd.f32 %v2115, %v2203
  %2205 = vmatmul.bf16.gmra.mxu0 %v1987
  %v2206 = vpop.f32.mrf.mxu0
  %v2207 = vadd.f32 %v2118, %v2206
  %v2208 = vpop.f32.mrf.mxu0
  %v2209 = vadd.f32 %v2120, %v2208
  %2210 = vmatmul.bf16.gmra.mxu0 %v1989
  %v2211 = vpop.f32.mrf.mxu0
  %v2212 = vadd.f32 %v2123, %v2211
  %v2213 = vpop.f32.mrf.mxu0
  %v2214 = vadd.f32 %v2125, %v2213
  %2215 = vdwg.mxu0
  %2216 = vst.msk [vmem:[%s10] sm:$0xff] %vm561, %v2137
  %2217 = vst.msk [vmem:[%s10 + $0x8] sm:$0xff] %vm561, %v2139
  %2218 = vst.msk [vmem:[%s10 + $0x10] sm:$0xff] %vm561, %v2142
  %2219 = vst.msk [vmem:[%s10 + $0x18] sm:$0xff] %vm561, %v2144
  %2220 = vst.msk [vmem:[%s10 + $0x20] sm:$0xff] %vm561, %v2147
  %2221 = vst.msk [vmem:[%s10 + $0x28] sm:$0xff] %vm561, %v2149
  %2222 = vst.msk [vmem:[%s10 + $0x30] sm:$0xff] %vm561, %v2152
  %2223 = vst.msk [vmem:[%s10 + $0x38] sm:$0xff] %vm561, %v2154
  %2224 = vst.msk [vmem:[%s10 + $0x40] sm:$0xff] %vm561, %v2157
  %2225 = vst.msk [vmem:[%s10 + $0x48] sm:$0xff] %vm561, %v2159
  %2226 = vst.msk [vmem:[%s10 + $0x50] sm:$0xff] %vm561, %v2162
  %2227 = vst.msk [vmem:[%s10 + $0x58] sm:$0xff] %vm561, %v2164
  %2228 = vst.msk [vmem:[%s10 + $0x60] sm:$0xff] %vm561, %v2167
  %2229 = vst.msk [vmem:[%s10 + $0x68] sm:$0xff] %vm561, %v2169
  %2230 = vst.msk [vmem:[%s10 + $0x70] sm:$0xff] %vm561, %v2172
  %2231 = vst.msk [vmem:[%s10 + $0x78] sm:$0xff] %vm561, %v2174
  %2232 = vst.msk [vmem:[%s10 + $0x80] sm:$0xff] %vm561, %v2177
  %2233 = vst.msk [vmem:[%s10 + $0x88] sm:$0xff] %vm561, %v2179
  %2234 = vst.msk [vmem:[%s10 + $0x90] sm:$0xff] %vm561, %v2182
  %2235 = vst.msk [vmem:[%s10 + $0x98] sm:$0xff] %vm561, %v2184
  %2236 = vst.msk [vmem:[%s10 + $0xa0] sm:$0xff] %vm561, %v2187
  %2237 = vst.msk [vmem:[%s10 + $0xa8] sm:$0xff] %vm561, %v2189
  %2238 = vst.msk [vmem:[%s10 + $0xb0] sm:$0xff] %vm561, %v2192
  %2239 = vst.msk [vmem:[%s10 + $0xb8] sm:$0xff] %vm561, %v2194
  %2240 = vst.msk [vmem:[%s10 + $0xc0] sm:$0xff] %vm561, %v2197
  %2241 = vst.msk [vmem:[%s10 + $0xc8] sm:$0xff] %vm561, %v2199
  %2242 = vst.msk [vmem:[%s10 + $0xd0] sm:$0xff] %vm561, %v2202
  %2243 = vst.msk [vmem:[%s10 + $0xd8] sm:$0xff] %vm561, %v2204
  %2244 = vst.msk [vmem:[%s10 + $0xe0] sm:$0xff] %vm561, %v2207
  %2245 = vst.msk [vmem:[%s10 + $0xe8] sm:$0xff] %vm561, %v2209
  %2246 = vst.msk [vmem:[%s10 + $0xf0] sm:$0xff] %vm561, %v2212
  %2247 = vst.msk [vmem:[%s10 + $0xf8] sm:$0xff] %vm561, %v2214
  %v2248 = vld [vmem:[%s8] sm:$0xff]
  %v2249 = vld [vmem:[%s8 + $0x8] sm:$0xff]
  %v2250 = vld [vmem:[%s8 + $0x10] sm:$0xff]
  %v2251 = vld [vmem:[%s8 + $0x18] sm:$0xff]
  %v2252 = vld [vmem:[%s8 + $0x20] sm:$0xff]
  %v2253 = vld [vmem:[%s8 + $0x28] sm:$0xff]
  %v2254 = vld [vmem:[%s8 + $0x30] sm:$0xff]
  %v2255 = vld [vmem:[%s8 + $0x38] sm:$0xff]
  %v2256 = vld [vmem:[%s8 + $0x40] sm:$0xff]
  %v2257 = vld [vmem:[%s8 + $0x48] sm:$0xff]
  %v2258 = vld [vmem:[%s8 + $0x50] sm:$0xff]
  %v2259 = vld [vmem:[%s8 + $0x58] sm:$0xff]
  %v2260 = vld [vmem:[%s8 + $0x60] sm:$0xff]
  %v2261 = vld [vmem:[%s8 + $0x68] sm:$0xff]
  %v2262 = vld [vmem:[%s8 + $0x70] sm:$0xff]
  %v2263 = vld [vmem:[%s8 + $0x78] sm:$0xff]
  %2264 = vset.pattern.permute.xlu0 0
  %2265 = vperm.xlu0 %2264, %v2248
  %v2266 = vpop.permute.xlu0 %2265
  %2267 = vset.pattern.permute.xlu0 0
  %2268 = vperm.xlu0 %2267, %v2249
  %v2269 = vpop.permute.xlu0 %2268
  %2270 = vset.pattern.permute.xlu0 0
  %2271 = vperm.xlu0 %2270, %v2250
  %v2272 = vpop.permute.xlu0 %2271
  %2273 = vset.pattern.permute.xlu0 0
  %2274 = vperm.xlu0 %2273, %v2251
  %v2275 = vpop.permute.xlu0 %2274
  %2276 = vset.pattern.permute.xlu0 0
  %2277 = vperm.xlu0 %2276, %v2252
  %v2278 = vpop.permute.xlu0 %2277
  %2279 = vset.pattern.permute.xlu0 0
  %2280 = vperm.xlu0 %2279, %v2253
  %v2281 = vpop.permute.xlu0 %2280
  %2282 = vset.pattern.permute.xlu0 0
  %2283 = vperm.xlu0 %2282, %v2254
  %v2284 = vpop.permute.xlu0 %2283
  %2285 = vset.pattern.permute.xlu0 0
  %2286 = vperm.xlu0 %2285, %v2255
  %v2287 = vpop.permute.xlu0 %2286
  %2288 = vset.pattern.permute.xlu0 0
  %2289 = vperm.xlu0 %2288, %v2256
  %v2290 = vpop.permute.xlu0 %2289
  %2291 = vset.pattern.permute.xlu0 0
  %2292 = vperm.xlu0 %2291, %v2257
  %v2293 = vpop.permute.xlu0 %2292
  %2294 = vset.pattern.permute.xlu0 0
  %2295 = vperm.xlu0 %2294, %v2258
  %v2296 = vpop.permute.xlu0 %2295
  %2297 = vset.pattern.permute.xlu0 0
  %2298 = vperm.xlu0 %2297, %v2259
  %v2299 = vpop.permute.xlu0 %2298
  %2300 = vset.pattern.permute.xlu0 0
  %2301 = vperm.xlu0 %2300, %v2260
  %v2302 = vpop.permute.xlu0 %2301
  %2303 = vset.pattern.permute.xlu0 0
  %2304 = vperm.xlu0 %2303, %v2261
  %v2305 = vpop.permute.xlu0 %2304
  %2306 = vset.pattern.permute.xlu0 0
  %2307 = vperm.xlu0 %2306, %v2262
  %v2308 = vpop.permute.xlu0 %2307
  %2309 = vset.pattern.permute.xlu0 0
  %2310 = vperm.xlu0 %2309, %v2263
  %v2311 = vpop.permute.xlu0 %2310
  %vm2312 = vcmp.eq.s32.totalorder %v1186, %v2266
  %vm2313 = vcmp.eq.s32.totalorder %v1187, %v2266
  %vm2314 = vcmp.eq.s32.totalorder %v1186, %v2269
  %vm2315 = vcmp.eq.s32.totalorder %v1187, %v2269
  %vm2316 = vcmp.eq.s32.totalorder %v1186, %v2272
  %vm2317 = vcmp.eq.s32.totalorder %v1187, %v2272
  %vm2318 = vcmp.eq.s32.totalorder %v1186, %v2275
  %vm2319 = vcmp.eq.s32.totalorder %v1187, %v2275
  %vm2320 = vcmp.eq.s32.totalorder %v1186, %v2278
  %vm2321 = vcmp.eq.s32.totalorder %v1187, %v2278
  %vm2322 = vcmp.eq.s32.totalorder %v1186, %v2281
  %vm2323 = vcmp.eq.s32.totalorder %v1187, %v2281
  %vm2324 = vcmp.eq.s32.totalorder %v1186, %v2284
  %vm2325 = vcmp.eq.s32.totalorder %v1187, %v2284
  %vm2326 = vcmp.eq.s32.totalorder %v1186, %v2287
  %vm2327 = vcmp.eq.s32.totalorder %v1187, %v2287
  %vm2328 = vcmp.eq.s32.totalorder %v1186, %v2290
  %vm2329 = vcmp.eq.s32.totalorder %v1187, %v2290
  %vm2330 = vcmp.eq.s32.totalorder %v1186, %v2293
  %vm2331 = vcmp.eq.s32.totalorder %v1187, %v2293
  %vm2332 = vcmp.eq.s32.totalorder %v1186, %v2296
  %vm2333 = vcmp.eq.s32.totalorder %v1187, %v2296
  %vm2334 = vcmp.eq.s32.totalorder %v1186, %v2299
  %vm2335 = vcmp.eq.s32.totalorder %v1187, %v2299
  %vm2336 = vcmp.eq.s32.totalorder %v1186, %v2302
  %vm2337 = vcmp.eq.s32.totalorder %v1187, %v2302
  %vm2338 = vcmp.eq.s32.totalorder %v1186, %v2305
  %vm2339 = vcmp.eq.s32.totalorder %v1187, %v2305
  %vm2340 = vcmp.eq.s32.totalorder %v1186, %v2308
  %vm2341 = vcmp.eq.s32.totalorder %v1187, %v2308
  %vm2342 = vcmp.eq.s32.totalorder %v1186, %v2311
  %vm2343 = vcmp.eq.s32.totalorder %v1187, %v2311
  %v2344 = vsel %vm2312, 1, 0
  %v2345 = vsel %vm2313, 1, 0
  %v2346 = vsel %vm2314, 1, 0
  %v2347 = vsel %vm2315, 1, 0
  %v2348 = vsel %vm2316, 1, 0
  %v2349 = vsel %vm2317, 1, 0
  %v2350 = vsel %vm2318, 1, 0
  %v2351 = vsel %vm2319, 1, 0
  %v2352 = vsel %vm2320, 1, 0
  %v2353 = vsel %vm2321, 1, 0
  %v2354 = vsel %vm2322, 1, 0
  %v2355 = vsel %vm2323, 1, 0
  %v2356 = vsel %vm2324, 1, 0
  %v2357 = vsel %vm2325, 1, 0
  %v2358 = vsel %vm2326, 1, 0
  %v2359 = vsel %vm2327, 1, 0
  %v2360 = vsel %vm2328, 1, 0
  %v2361 = vsel %vm2329, 1, 0
  %v2362 = vsel %vm2330, 1, 0
  %v2363 = vsel %vm2331, 1, 0
  %v2364 = vsel %vm2332, 1, 0
  %v2365 = vsel %vm2333, 1, 0
  %v2366 = vsel %vm2334, 1, 0
  %v2367 = vsel %vm2335, 1, 0
  %v2368 = vsel %vm2336, 1, 0
  %v2369 = vsel %vm2337, 1, 0
  %v2370 = vsel %vm2338, 1, 0
  %v2371 = vsel %vm2339, 1, 0
  %v2372 = vsel %vm2340, 1, 0
  %v2373 = vsel %vm2341, 1, 0
  %v2374 = vsel %vm2342, 1, 0
  %v2375 = vsel %vm2343, 1, 0
  %v2376 = vcvt.s32.f32 %v2344
  %v2377 = vcvt.s32.f32 %v2345
  %v2378 = vcvt.s32.f32 %v2346
  %v2379 = vcvt.s32.f32 %v2347
  %v2380 = vcvt.s32.f32 %v2348
  %v2381 = vcvt.s32.f32 %v2349
  %v2382 = vcvt.s32.f32 %v2350
  %v2383 = vcvt.s32.f32 %v2351
  %v2384 = vcvt.s32.f32 %v2352
  %v2385 = vcvt.s32.f32 %v2353
  %v2386 = vcvt.s32.f32 %v2354
  %v2387 = vcvt.s32.f32 %v2355
  %v2388 = vcvt.s32.f32 %v2356
  %v2389 = vcvt.s32.f32 %v2357
  %v2390 = vcvt.s32.f32 %v2358
  %v2391 = vcvt.s32.f32 %v2359
  %v2392 = vcvt.s32.f32 %v2360
  %v2393 = vcvt.s32.f32 %v2361
  %v2394 = vcvt.s32.f32 %v2362
  %v2395 = vcvt.s32.f32 %v2363
  %v2396 = vcvt.s32.f32 %v2364
  %v2397 = vcvt.s32.f32 %v2365
  %v2398 = vcvt.s32.f32 %v2366
  %v2399 = vcvt.s32.f32 %v2367
  %v2400 = vcvt.s32.f32 %v2368
  %v2401 = vcvt.s32.f32 %v2369
  %v2402 = vcvt.s32.f32 %v2370
  %v2403 = vcvt.s32.f32 %v2371
  %v2404 = vcvt.s32.f32 %v2372
  %v2405 = vcvt.s32.f32 %v2373
  %v2406 = vcvt.s32.f32 %v2374
  %v2407 = vcvt.s32.f32 %v2375
  %v2408 = vpack.c.bf16 %v2378, %v2376
  %v2409 = vpack.c.bf16 %v2379, %v2377
  %v2410 = vpack.c.bf16 %v2382, %v2380
  %v2411 = vpack.c.bf16 %v2383, %v2381
  %v2412 = vpack.c.bf16 %v2386, %v2384
  %v2413 = vpack.c.bf16 %v2387, %v2385
  %v2414 = vpack.c.bf16 %v2390, %v2388
  %v2415 = vpack.c.bf16 %v2391, %v2389
  %v2416 = vpack.c.bf16 %v2394, %v2392
  %v2417 = vpack.c.bf16 %v2395, %v2393
  %v2418 = vpack.c.bf16 %v2398, %v2396
  %v2419 = vpack.c.bf16 %v2399, %v2397
  %v2420 = vpack.c.bf16 %v2402, %v2400
  %v2421 = vpack.c.bf16 %v2403, %v2401
  %v2422 = vpack.c.bf16 %v2406, %v2404
  %v2423 = vpack.c.bf16 %v2407, %v2405
  %v2424 = vpack.c.bf16 %v2139, %v2137
  %v2425 = vpack.c.bf16 %v2144, %v2142
  %v2426 = vpack.c.bf16 %v2149, %v2147
  %v2427 = vpack.c.bf16 %v2154, %v2152
  %v2428 = vpack.c.bf16 %v2159, %v2157
  %v2429 = vpack.c.bf16 %v2164, %v2162
  %v2430 = vpack.c.bf16 %v2169, %v2167
  %v2431 = vpack.c.bf16 %v2174, %v2172
  %v2432 = vpack.c.bf16 %v2179, %v2177
  %v2433 = vpack.c.bf16 %v2184, %v2182
  %v2434 = vpack.c.bf16 %v2189, %v2187
  %v2435 = vpack.c.bf16 %v2194, %v2192
  %v2436 = vpack.c.bf16 %v2199, %v2197
  %v2437 = vpack.c.bf16 %v2204, %v2202
  %v2438 = vpack.c.bf16 %v2209, %v2207
  %v2439 = vpack.c.bf16 %v2214, %v2212
  %2440 = vmatpush.bf16.msra.mxu0 %v2431
  %2441 = vmatpush.bf16.msra.mxu0 %v2430
  %2442 = vmatpush.bf16.msra.mxu0 %v2429
  %2443 = vmatpush.bf16.msra.mxu0 %v2428
  %2444 = vmatpush.bf16.msra.mxu0 %v2427
  %2445 = vmatpush.bf16.msra.mxu0 %v2426
  %2446 = vmatpush.bf16.msra.mxu0 %v2425
  %2447 = vmatpush.bf16.msra.mxu0 %v2424
  %2448 = vmatmul.bf16.gmra.mxu0 %v2408
  %v2449 = vpop.f32.mrf.mxu0
  %v2450 = vadd.f32 0.0, %v2449
  %v2451 = vpop.f32.mrf.mxu0
  %v2452 = vadd.f32 0.0, %v2451
  %2453 = vmatmul.bf16.gmra.mxu0 %v2410
  %v2454 = vpop.f32.mrf.mxu0
  %v2455 = vadd.f32 0.0, %v2454
  %v2456 = vpop.f32.mrf.mxu0
  %v2457 = vadd.f32 0.0, %v2456
  %2458 = vmatmul.bf16.gmra.mxu0 %v2412
  %v2459 = vpop.f32.mrf.mxu0
  %v2460 = vadd.f32 0.0, %v2459
  %v2461 = vpop.f32.mrf.mxu0
  %v2462 = vadd.f32 0.0, %v2461
  %2463 = vmatmul.bf16.gmra.mxu0 %v2414
  %v2464 = vpop.f32.mrf.mxu0
  %v2465 = vadd.f32 0.0, %v2464
  %v2466 = vpop.f32.mrf.mxu0
  %v2467 = vadd.f32 0.0, %v2466
  %2468 = vmatmul.bf16.gmra.mxu0 %v2416
  %v2469 = vpop.f32.mrf.mxu0
  %v2470 = vadd.f32 0.0, %v2469
  %v2471 = vpop.f32.mrf.mxu0
  %v2472 = vadd.f32 0.0, %v2471
  %2473 = vmatmul.bf16.gmra.mxu0 %v2418
  %v2474 = vpop.f32.mrf.mxu0
  %v2475 = vadd.f32 0.0, %v2474
  %v2476 = vpop.f32.mrf.mxu0
  %v2477 = vadd.f32 0.0, %v2476
  %2478 = vmatmul.bf16.gmra.mxu0 %v2420
  %v2479 = vpop.f32.mrf.mxu0
  %v2480 = vadd.f32 0.0, %v2479
  %v2481 = vpop.f32.mrf.mxu0
  %v2482 = vadd.f32 0.0, %v2481
  %2483 = vmatmul.bf16.gmra.mxu0 %v2422
  %v2484 = vpop.f32.mrf.mxu0
  %v2485 = vadd.f32 0.0, %v2484
  %v2486 = vpop.f32.mrf.mxu0
  %v2487 = vadd.f32 0.0, %v2486
  %2488 = vdwg.mxu0
  %2489 = vmatpush.bf16.msra.mxu0 %v2439
  %2490 = vmatpush.bf16.msra.mxu0 %v2438
  %2491 = vmatpush.bf16.msra.mxu0 %v2437
  %2492 = vmatpush.bf16.msra.mxu0 %v2436
  %2493 = vmatpush.bf16.msra.mxu0 %v2435
  %2494 = vmatpush.bf16.msra.mxu0 %v2434
  %2495 = vmatpush.bf16.msra.mxu0 %v2433
  %2496 = vmatpush.bf16.msra.mxu0 %v2432
  %2497 = vmatmul.bf16.gmra.mxu0 %v2409
  %v2498 = vpop.f32.mrf.mxu0
  %v2499 = vadd.f32 %v2450, %v2498
  %v2500 = vpop.f32.mrf.mxu0
  %v2501 = vadd.f32 %v2452, %v2500
  %2502 = vmatmul.bf16.gmra.mxu0 %v2411
  %v2503 = vpop.f32.mrf.mxu0
  %v2504 = vadd.f32 %v2455, %v2503
  %v2505 = vpop.f32.mrf.mxu0
  %v2506 = vadd.f32 %v2457, %v2505
  %2507 = vmatmul.bf16.gmra.mxu0 %v2413
  %v2508 = vpop.f32.mrf.mxu0
  %v2509 = vadd.f32 %v2460, %v2508
  %v2510 = vpop.f32.mrf.mxu0
  %v2511 = vadd.f32 %v2462, %v2510
  %2512 = vmatmul.bf16.gmra.mxu0 %v2415
  %v2513 = vpop.f32.mrf.mxu0
  %v2514 = vadd.f32 %v2465, %v2513
  %v2515 = vpop.f32.mrf.mxu0
  %v2516 = vadd.f32 %v2467, %v2515
  %2517 = vmatmul.bf16.gmra.mxu0 %v2417
  %v2518 = vpop.f32.mrf.mxu0
  %v2519 = vadd.f32 %v2470, %v2518
  %v2520 = vpop.f32.mrf.mxu0
  %v2521 = vadd.f32 %v2472, %v2520
  %2522 = vmatmul.bf16.gmra.mxu0 %v2419
  %v2523 = vpop.f32.mrf.mxu0
  %v2524 = vadd.f32 %v2475, %v2523
  %v2525 = vpop.f32.mrf.mxu0
  %v2526 = vadd.f32 %v2477, %v2525
  %2527 = vmatmul.bf16.gmra.mxu0 %v2421
  %v2528 = vpop.f32.mrf.mxu0
  %v2529 = vadd.f32 %v2480, %v2528
  %v2530 = vpop.f32.mrf.mxu0
  %v2531 = vadd.f32 %v2482, %v2530
  %2532 = vmatmul.bf16.gmra.mxu0 %v2423
  %v2533 = vpop.f32.mrf.mxu0
  %v2534 = vadd.f32 %v2485, %v2533
  %v2535 = vpop.f32.mrf.mxu0
  %v2536 = vadd.f32 %v2487, %v2535
  %2537 = vdwg.mxu0
  %v2538 = vmul.f32 %v2499, %v2519
  %v2539 = vmul.f32 %v2501, %v2521
  %v2540 = vmul.f32 %v2504, %v2524
  %v2541 = vmul.f32 %v2506, %v2526
  %v2542 = vmul.f32 %v2509, %v2529
  %v2543 = vmul.f32 %v2511, %v2531
  %v2544 = vmul.f32 %v2514, %v2534
  %v2545 = vmul.f32 %v2516, %v2536
  %v2546 = vld [vmem:[%s4] sm:$0xff]
  %v2547 = vld [vmem:[%s4 + $0x8] sm:$0xff]
  %v2548 = vld [vmem:[%s5] sm:$0x1]
  %v2550 = vperm.slane %v2548, 0
  %v2553 = vsel %vm561, %v2538, 0
  %v2556 = vsel %vm561, %v2539, 0
  %v2559 = vsel %vm561, %v2540, 0
  %v2562 = vsel %vm561, %v2541, 0
  %v2565 = vsel %vm561, %v2542, 0
  %v2568 = vsel %vm561, %v2543, 0
  %v2571 = vsel %vm561, %v2544, 0
  %v2574 = vsel %vm561, %v2545, 0
  %2576 = vmatpush.msra.mxu0 0.0
  %2577 = vmatpush.msra.mxu0 0.0
  %2578 = vmatpush.msra.mxu0 0.0
  %2579 = vmatpush.msra.mxu0 0.0
  %2580 = vmatpush.msra.mxu0 0.0
  %2581 = vmatpush.msra.mxu0 0.0
  %2582 = vmatpush.msra.mxu0 0.0
  %2583 = vmatpush.msra.mxu0 0.0
  %2584 = vmatpush.msra.mxu0 0.0
  %2585 = vmatpush.msra.mxu0 0.0
  %2586 = vmatpush.msra.mxu0 0.0
  %2587 = vmatpush.msra.mxu0 0.0
  %2588 = vmatpush.msra.mxu0 0.0
  %2589 = vmatpush.msra.mxu0 0.0
  %2590 = vmatpush.msra.mxu0 %v2547
  %2591 = vmatpush.msra.mxu0 %v2546
  %2592 = vmatmul.f32.gmra.mxu0 %v2553
  %v2593 = vpop.f32.mrf.mxu0
  %v2594 = vadd.f32 %v2550, %v2593
  %2595 = vmatmul.f32.gmra.mxu0 %v2556
  %v2596 = vpop.f32.mrf.mxu0
  %v2597 = vadd.f32 %v2550, %v2596
  %2598 = vmatmul.f32.gmra.mxu0 %v2559
  %v2599 = vpop.f32.mrf.mxu0
  %v2600 = vadd.f32 %v2550, %v2599
  %2601 = vmatmul.f32.gmra.mxu0 %v2562
  %v2602 = vpop.f32.mrf.mxu0
  %v2603 = vadd.f32 %v2550, %v2602
  %2604 = vmatmul.f32.gmra.mxu0 %v2565
  %v2605 = vpop.f32.mrf.mxu0
  %v2606 = vadd.f32 %v2550, %v2605
  %2607 = vmatmul.f32.gmra.mxu0 %v2568
  %v2608 = vpop.f32.mrf.mxu0
  %v2609 = vadd.f32 %v2550, %v2608
  %2610 = vmatmul.f32.gmra.mxu0 %v2571
  %v2611 = vpop.f32.mrf.mxu0
  %v2612 = vadd.f32 %v2550, %v2611
  %2613 = vmatmul.f32.gmra.mxu0 %v2574
  %v2614 = vpop.f32.mrf.mxu0
  %v2615 = vadd.f32 %v2550, %v2614
  %2616 = vdwg.mxu0
  %v2617 = vmax.f32 %v2594, 0.0
  %v2618 = vmax.f32 %v2597, 0.0
  %v2619 = vmax.f32 %v2600, 0.0
  %v2620 = vmax.f32 %v2603, 0.0
  %v2621 = vmax.f32 %v2606, 0.0
  %v2622 = vmax.f32 %v2609, 0.0
  %v2623 = vmax.f32 %v2612, 0.0
  %v2624 = vmax.f32 %v2615, 0.0
  %v2625 = vld [vmem:[%s6] sm:$0xff]
  %v2626 = vld [vmem:[%s6 + $0x8] sm:$0xff]
  %v2627 = vld [vmem:[%s7] sm:$0x1]
  %v2629 = vperm.slane %v2627, 0
  %v2632 = vsel %vm561, %v2617, 0
  %v2635 = vsel %vm561, %v2618, 0
  %v2638 = vsel %vm561, %v2619, 0
  %v2641 = vsel %vm561, %v2620, 0
  %v2644 = vsel %vm561, %v2621, 0
  %v2647 = vsel %vm561, %v2622, 0
  %v2650 = vsel %vm561, %v2623, 0
  %v2653 = vsel %vm561, %v2624, 0
  %2655 = vmatpush.msra.mxu0 0.0
  %2656 = vmatpush.msra.mxu0 0.0
  %2657 = vmatpush.msra.mxu0 0.0
  %2658 = vmatpush.msra.mxu0 0.0
  %2659 = vmatpush.msra.mxu0 0.0
  %2660 = vmatpush.msra.mxu0 0.0
  %2661 = vmatpush.msra.mxu0 0.0
  %2662 = vmatpush.msra.mxu0 0.0
  %2663 = vmatpush.msra.mxu0 0.0
  %2664 = vmatpush.msra.mxu0 0.0
  %2665 = vmatpush.msra.mxu0 0.0
  %2666 = vmatpush.msra.mxu0 0.0
  %2667 = vmatpush.msra.mxu0 0.0
  %2668 = vmatpush.msra.mxu0 0.0
  %2669 = vmatpush.msra.mxu0 %v2626
  %2670 = vmatpush.msra.mxu0 %v2625
  %2671 = vmatmul.f32.gmra.mxu0 %v2632
  %v2672 = vpop.f32.mrf.mxu0
  %v2673 = vadd.f32 %v2629, %v2672
  %2674 = vmatmul.f32.gmra.mxu0 %v2635
  %v2675 = vpop.f32.mrf.mxu0
  %v2676 = vadd.f32 %v2629, %v2675
  %2677 = vmatmul.f32.gmra.mxu0 %v2638
  %v2678 = vpop.f32.mrf.mxu0
  %v2679 = vadd.f32 %v2629, %v2678
  %2680 = vmatmul.f32.gmra.mxu0 %v2641
  %v2681 = vpop.f32.mrf.mxu0
  %v2682 = vadd.f32 %v2629, %v2681
  %2683 = vmatmul.f32.gmra.mxu0 %v2644
  %v2684 = vpop.f32.mrf.mxu0
  %v2685 = vadd.f32 %v2629, %v2684
  %2686 = vmatmul.f32.gmra.mxu0 %v2647
  %v2687 = vpop.f32.mrf.mxu0
  %v2688 = vadd.f32 %v2629, %v2687
  %2689 = vmatmul.f32.gmra.mxu0 %v2650
  %v2690 = vpop.f32.mrf.mxu0
  %v2691 = vadd.f32 %v2629, %v2690
  %2692 = vmatmul.f32.gmra.mxu0 %v2653
  %v2693 = vpop.f32.mrf.mxu0
  %v2694 = vadd.f32 %v2629, %v2693
  %2695 = vdwg.mxu0
  %vm2696 = vcmask 15360
  %2697 = vst.msk [vmem:[%s11] sm:$0xff] %vm2696, %v2673
  %2698 = vst.msk [vmem:[%s11 + $0x8] sm:$0xff] %vm2696, %v2676
  %2699 = vst.msk [vmem:[%s11 + $0x10] sm:$0xff] %vm2696, %v2679
  %2700 = vst.msk [vmem:[%s11 + $0x18] sm:$0xff] %vm2696, %v2682
  %2701 = vst.msk [vmem:[%s11 + $0x20] sm:$0xff] %vm2696, %v2685
  %2702 = vst.msk [vmem:[%s11 + $0x28] sm:$0xff] %vm2696, %v2688
  %2703 = vst.msk [vmem:[%s11 + $0x30] sm:$0xff] %vm2696, %v2691
  %2704 = vst.msk [vmem:[%s11 + $0x38] sm:$0xff] %vm2696, %v2694
  // Predicated region
  $region38: #{my_model_forward.1} parent=0 // pred_check
    _
  $region39: #{my_model_forward.1} parent=0 // pred_check_branch
    %2706 = sbr.rel (0) target = $region41
  $region40: #{my_model_forward.1} parent=0 // pred_region
    _
  $region41: #{my_model_forward.1} parent=0 // pred_fallthru
    _
  // Predicated region
  $region42: #{my_model_forward.1} parent=0 // pred_check
    _
  $region43: #{my_model_forward.1} parent=0 // pred_check_branch
    %2708 = sbr.rel (0) target = $region45
  $region44: #{my_model_forward.1} parent=0 // pred_region
    _
  $region45: #{my_model_forward.1} parent=0 // pred_fallthru
    _
  // Predicated region
  $region46: #{my_model_forward.1} parent=0 // pred_check
    _
  $region47: #{my_model_forward.1} parent=0 // pred_check_branch
    %2710 = sbr.rel (0) target = $region49
  $region48: #{my_model_forward.1} parent=0 // pred_region
    _
  $region49: #{my_model_forward.1} parent=0 // pred_fallthru
    _
  // Predicated region
  $region50: #{my_model_forward.1} parent=0 // pred_check
    _
  $region51: #{my_model_forward.1} parent=0 // pred_check_branch
    %2712 = sbr.rel (0) target = $region53
  $region52: #{my_model_forward.1} parent=0 // pred_region
    _
  $region53: #{my_model_forward.1} parent=0 // pred_fallthru
    _
  // Predicated region
  $region54: #{my_model_forward.1} parent=0 // pred_check
    _
  $region55: #{my_model_forward.1} parent=0 // pred_check_branch
    %2714 = sbr.rel (0) target = $region57
  $region56: #{my_model_forward.1} parent=0 // pred_region
    _
  $region57: #{my_model_forward.1} parent=0 // pred_fallthru
    _
  // Predicated region
  $region58: #{my_model_forward.1} parent=0 // pred_check
    _
  $region59: #{my_model_forward.1} parent=0 // pred_check_branch
    %2716 = sbr.rel (0) target = $region61
  $region60: #{my_model_forward.1} parent=0 // pred_region
    _
  $region61: #{my_model_forward.1} parent=0 // pred_fallthru
    _

</llo_original>
